<compile_context>
chip_gen: v7x
topology: tpu7x:2x2x1
jax: 0.10.0
libtpu: 0.0.40
codegen_flags: <defaults>
</compile_context>

<pallas_src>
import jax
import jax.numpy as jnp
from jax.experimental import pallas as pl
from jax.experimental.pallas import tpu as pltpu


def _round_up(n, m):
    return ((n + m - 1) // m) * m


def _mlp_kernel(x_ref, w1_ref, b1_ref, w2_ref, b2_ref, w3_ref, b3_ref, o_ref):
    """Fused Linear->ReLU->Linear->ReLU->Linear over one (tm, embed) batch tile."""
    cdt = w1_ref.dtype
    # Cast after the DMA so x streams from HBM in its native dtype (no wrapper copy).
    x = x_ref[...].astype(cdt)
    # Layers 1 & 2: MXU matmuls with f32 accumulation, f32 bias + ReLU on the VPU.
    h = jnp.dot(x, w1_ref[...], preferred_element_type=jnp.float32) + b1_ref[...]
    h = jnp.maximum(h, 0.0).astype(cdt)
    h = jnp.dot(h, w2_ref[...], preferred_element_type=jnp.float32) + b2_ref[...]
    h = jnp.maximum(h, 0.0)
    # Layer 3 (hidden -> 1) as a VPU multiply + cross-lane reduce instead of a
    # padded 128-wide MXU pass; yields the narrow (tm, 1) score column directly.
    w3_row = w3_ref[...].astype(jnp.float32)                    # (1, hidden)
    o_ref[...] = jnp.sum(h * w3_row, axis=-1, keepdims=True) + b3_ref[...]


def prepare_params(params, compute_dtype=jnp.bfloat16):
    """Cast/lay out the classifier parameters once (amortized at init).

    Weights -> compute_dtype, biases -> f32, w3 -> (1, hidden) row, b3 -> (1, 1).
    """
    w1, b1, w2, b2, w3, b3 = params
    cdt = compute_dtype
    return (
        jnp.asarray(w1, cdt),
        jnp.asarray(b1, jnp.float32).reshape(1, -1),
        jnp.asarray(w2, cdt),
        jnp.asarray(b2, jnp.float32).reshape(1, -1),
        jnp.asarray(w3, cdt).reshape(1, -1),     # (hidden, 1) -> (1, hidden)
        jnp.asarray(b3, jnp.float32).reshape(1, 1),
    )


def nlp_biased_learner_forward(x, params, x_len=None, *,
                               compute_dtype=jnp.bfloat16,
                               block_batch=1024,
                               prepared=False,
                               use_pallas=True):
    """JAX/Pallas port of NlpBiasedLearner.forward(x, x_len) (non-RNN path).

    compute_dtype=bfloat16 by default (full-rate MXU, half the weight DMA);
    accumulation and biases stay f32.  Pass compute_dtype=jnp.float32 for a
    bit-faithful match of the torch f32 reference.
    """
    del x_len  # ignored by the feed-forward (embedding_weights=None) path
    if not prepared:
        params = prepare_params(params, compute_dtype)
    w1, b1, w2, b2, w3, b3 = params
    batch, embed = x.shape
    hidden = w1.shape[1]

    if not use_pallas:
        # Tiny-problem fallback: plain XLA, same math as the kernel.
        cdt = w1.dtype
        h = jnp.maximum(
            jnp.dot(x.astype(cdt), w1, preferred_element_type=jnp.float32) + b1, 0.0
        ).astype(cdt)
        h = jnp.maximum(
            jnp.dot(h, w2, preferred_element_type=jnp.float32) + b2, 0.0)
        return (jnp.sum(h * w3.astype(jnp.float32), axis=-1, keepdims=True) + b3).squeeze()

    # ---- Batch tile -------------------------------------------------------
    # Big tile (default 1024 rows) so the ~0.35us per-grid-step overhead is
    # amortized, but capped at ceil(batch/2) so the "parallel" grid has >=2
    # steps (both v7x TensorCores get work).  Sublane granularity: 8 for f32
    # inputs, 16 for narrower packed dtypes.
    sub = 8 if jnp.dtype(x.dtype).itemsize >= 4 else 16
    block_batch = max(_round_up(int(block_batch), sub), sub)
    half = -(-batch // 2)
    tm = max(min(block_batch, _round_up(half, sub)), sub)
    grid0 = -(-batch // tm)        # ragged tail -> partial last block (writes masked)

    # ---- VMEM budget (weights once + double-buffered x/out tiles) ---------
    w_bytes = sum(int(v.size) * jnp.dtype(v.dtype).itemsize
                  for v in (w1, b1, w2, b2, w3, b3))
    est = (2 * tm * embed * jnp.dtype(x.dtype).itemsize   # x tile, 2 buffers
           + 2 * tm * 4                                   # (tm, 1) f32 out, 2 buffers
           + 2 * w_bytes                                  # weights (headroom for 2x)
           + (1 << 20))                                   # slack
    vmem_limit = int(min(max(2 * est, 32 << 20), 64 << 20))

    compiler_params = pltpu.CompilerParams(
        dimension_semantics=("parallel",),   # shard batch tiles across TCs (v7x)
        vmem_limit_bytes=vmem_limit,
    )

    def _call(single_buffer_weights):
        def _resident(shape):
            # Constant block index -> weights/biases stay VMEM-resident for the
            # whole grid; with Buffered(1) they also keep a single buffer.
            idx = lambda i: (0,) * len(shape)
            if single_buffer_weights:
                try:
                    return pl.BlockSpec(shape, idx, pipeline_mode=pl.Buffered(1))
                except TypeError:
                    pass
            return pl.BlockSpec(shape, idx)

        return pl.pallas_call(
            _mlp_kernel,
            out_shape=jax.ShapeDtypeStruct((batch, 1), jnp.float32),
            grid=(grid0,),
            in_specs=[
                # Stream x by batch tile; last block dim == full embed dim, so no
                # 128-padding of x is needed even when embed % 128 != 0.
                pl.BlockSpec((tm, embed), lambda i: (i, 0)),
                _resident(w1.shape), _resident(b1.shape),
                _resident(w2.shape), _resident(b2.shape),
                _resident(w3.shape), _resident(b3.shape),
            ],
            # Narrow (tm, 1) output block: last dim equals the full output width,
            # so only the true score column is written back to HBM.
            out_specs=pl.BlockSpec((tm, 1), lambda i: (i, 0)),
            compiler_params=compiler_params,
        )(x, w1, b1, w2, b2, w3, b3)

    try:
        out = _call(True)
    except Exception:
        # Fall back to default (double-buffered) weight pipelining if the
        # running JAX rejects pipeline_mode=Buffered(1).
        out = _call(False)

    # Same .squeeze() as NlpBiasedLearner.forward: (batch, 1) -> (batch,).
    return out.squeeze()


def _init_linear(kw, kb, fan_in, fan_out):
    """Deterministic init mimicking torch.nn.Linear default (uniform +-1/sqrt(fan_in))."""
    bound = 1.0 / (fan_in ** 0.5)
    w = jax.random.uniform(kw, (fan_in, fan_out), jnp.float32, -bound, bound)
    b = jax.random.uniform(kb, (1, fan_out), jnp.float32, -bound, bound)
    return w, b


if __name__ == "__main__":
    batch, embed_dim, hidden = 24, 32, 32     # exercises a ragged 2-step grid

    key = jax.random.PRNGKey(0)
    k = jax.random.split(key, 7)
    w1, b1 = _init_linear(k[0], k[1], embed_dim, hidden)
    w2, b2 = _init_linear(k[2], k[3], hidden, hidden)
    w3, b3 = _init_linear(k[4], k[5], hidden, 1)
    params = (w1, b1, w2, b2, w3, b3)

    x = jax.random.normal(k[6], (batch, embed_dim), jnp.float32)

    # Pure-JAX reference (f32).
    h = jnp.maximum(x @ w1 + b1, 0.0)
    h = jnp.maximum(h @ w2 + b2, 0.0)
    ref = (h @ w3 + b3).squeeze()

    # Default path: bf16 inputs/weights, f32 accumulation.
    out_bf16 = jax.block_until_ready(nlp_biased_learner_forward(x, params))
    # Strict-accuracy path: f32 everywhere.
    out_f32 = jax.block_until_ready(
        nlp_biased_learner_forward(x, params, compute_dtype=jnp.float32))
    # XLA fallback path (tiny problems).
    out_ref_path = jax.block_until_ready(
        nlp_biased_learner_forward(x, params, compute_dtype=jnp.float32,
                                   use_pallas=False))

    assert out_bf16.shape == (batch,), out_bf16.shape
    assert out_f32.shape == (batch,), out_f32.shape
    assert jnp.allclose(out_f32, ref, atol=1e-3, rtol=1e-3), "f32 path mismatch"
    assert jnp.allclose(out_bf16, ref, atol=0.1, rtol=0.1), "bf16 path mismatch"
    assert jnp.allclose(out_ref_path, ref, atol=1e-3, rtol=1e-3), "fallback mismatch"

    print("KERNEL_OK")
</pallas_src>

<mosaic_0001>
module attributes {stable_mosaic.version = 11 : i64} {
  func.func @_mlp_kernel(%arg0: i32, %arg1: memref<16x32xf32, #tpu.memory_space<vmem>>, %arg2: memref<32x32xbf16, #tpu.memory_space<vmem>>, %arg3: memref<1x32xf32, #tpu.memory_space<vmem>>, %arg4: memref<32x32xbf16, #tpu.memory_space<vmem>>, %arg5: memref<1x32xf32, #tpu.memory_space<vmem>>, %arg6: memref<1x32xbf16, #tpu.memory_space<vmem>>, %arg7: memref<1x1xf32, #tpu.memory_space<vmem>>, %arg8: memref<16x1xf32, #tpu.memory_space<vmem>>) attributes {dimension_semantics = [#tpu.dimension_semantics<parallel>], iteration_bounds = array<i64: 2>, scalar_prefetch = 0 : i64, scratch_operands = 0 : i64, tpu.core_type = #tpu.core_type<tc>, window_params = [{transform_indices = @transform_0, window_bounds = array<i64: 16, 32>}, {pipeline_mode = #tpu.pipeline_mode<synchronous>, transform_indices = @transform_1, window_bounds = array<i64: 32, 32>}, {pipeline_mode = #tpu.pipeline_mode<synchronous>, transform_indices = @transform_2, window_bounds = array<i64: 1, 32>}, {pipeline_mode = #tpu.pipeline_mode<synchronous>, transform_indices = @transform_3, window_bounds = array<i64: 32, 32>}, {pipeline_mode = #tpu.pipeline_mode<synchronous>, transform_indices = @transform_4, window_bounds = array<i64: 1, 32>}, {pipeline_mode = #tpu.pipeline_mode<synchronous>, transform_indices = @transform_5, window_bounds = array<i64: 1, 32>}, {pipeline_mode = #tpu.pipeline_mode<synchronous>, transform_indices = @transform_6, window_bounds = array<i64: 1, 1>}, {transform_indices = @transform_7, window_bounds = array<i64: 16, 1>}]} {
    %c0 = arith.constant 0 : index
    %c0_0 = arith.constant 0 : index
    %0 = vector.load %arg1[%c0, %c0_0] : memref<16x32xf32, #tpu.memory_space<vmem>>, vector<16x32xf32>
    %1 = arith.truncf %0 : vector<16x32xf32> to vector<16x32xbf16>
    %c0_1 = arith.constant 0 : index
    %c0_2 = arith.constant 0 : index
    %2 = vector.load %arg2[%c0_1, %c0_2] : memref<32x32xbf16, #tpu.memory_space<vmem>>, vector<32x32xbf16>
    %cst = arith.constant dense<0.000000e+00> : vector<16x32xf32>
    %3 = tpu.matmul %1, %2, %cst {dimension_numbers = #tpu.dot_dimension_numbers<[1], [0], [0], [1], [0, 0, 1, 1], [], []>} : vector<16x32xbf16>, vector<32x32xbf16>, vector<16x32xf32> -> vector<16x32xf32>
    %c0_3 = arith.constant 0 : index
    %c0_4 = arith.constant 0 : index
    %4 = vector.load %arg3[%c0_3, %c0_4] : memref<1x32xf32, #tpu.memory_space<vmem>>, vector<1x32xf32>
    %5 = vector.broadcast %4 : vector<1x32xf32> to vector<16x32xf32>
    %6 = arith.addf %3, %5 : vector<16x32xf32>
    %cst_5 = arith.constant 0.000000e+00 : f32
    %7 = vector.broadcast %cst_5 : f32 to vector<16x32xf32>
    %8 = arith.maximumf %6, %7 : vector<16x32xf32>
    %9 = arith.truncf %8 : vector<16x32xf32> to vector<16x32xbf16>
    %c0_6 = arith.constant 0 : index
    %c0_7 = arith.constant 0 : index
    %10 = vector.load %arg4[%c0_6, %c0_7] : memref<32x32xbf16, #tpu.memory_space<vmem>>, vector<32x32xbf16>
    %cst_8 = arith.constant dense<0.000000e+00> : vector<16x32xf32>
    %11 = tpu.matmul %9, %10, %cst_8 {dimension_numbers = #tpu.dot_dimension_numbers<[1], [0], [0], [1], [0, 0, 1, 1], [], []>} : vector<16x32xbf16>, vector<32x32xbf16>, vector<16x32xf32> -> vector<16x32xf32>
    %c0_9 = arith.constant 0 : index
    %c0_10 = arith.constant 0 : index
    %12 = vector.load %arg5[%c0_9, %c0_10] : memref<1x32xf32, #tpu.memory_space<vmem>>, vector<1x32xf32>
    %13 = vector.broadcast %12 : vector<1x32xf32> to vector<16x32xf32>
    %14 = arith.addf %11, %13 : vector<16x32xf32>
    %cst_11 = arith.constant 0.000000e+00 : f32
    %15 = vector.broadcast %cst_11 : f32 to vector<16x32xf32>
    %16 = arith.maximumf %14, %15 : vector<16x32xf32>
    %c0_12 = arith.constant 0 : index
    %c0_13 = arith.constant 0 : index
    %17 = vector.load %arg6[%c0_12, %c0_13] : memref<1x32xbf16, #tpu.memory_space<vmem>>, vector<1x32xbf16>
    %18 = arith.extf %17 : vector<1x32xbf16> to vector<1x32xf32>
    %19 = vector.broadcast %18 : vector<1x32xf32> to vector<16x32xf32>
    %20 = arith.mulf %16, %19 : vector<16x32xf32>
    %cst_14 = arith.constant dense<0.000000e+00> : vector<16xf32>
    %21 = vector.multi_reduction <add>, %20, %cst_14 [1] : vector<16x32xf32> to vector<16xf32>
    %22 = vector.shape_cast %21 : vector<16xf32> to vector<16x1xf32>
    %c0_15 = arith.constant 0 : index
    %c0_16 = arith.constant 0 : index
    %23 = vector.load %arg7[%c0_15, %c0_16] : memref<1x1xf32, #tpu.memory_space<vmem>>, vector<1x1xf32>
    %24 = vector.broadcast %23 : vector<1x1xf32> to vector<16x1xf32>
    %25 = arith.addf %22, %24 : vector<16x1xf32>
    %c0_17 = arith.constant 0 : index
    %c0_18 = arith.constant 0 : index
    %26 = vector.load %arg8[%c0_17, %c0_18] : memref<16x1xf32, #tpu.memory_space<vmem>>, vector<16x1xf32>
    tpu.vector_store %arg8[%c0_17, %c0_18], %25 {strides = array<i32>} : memref<16x1xf32, #tpu.memory_space<vmem>>, vector<16x1xf32>,
    return
  }
  func.func @transform_0(%arg0: i32) -> (i32, i32) {
    %c0_i32 = arith.constant 0 : i32
    %c0_i32_0 = arith.constant 0 : i32
    return %arg0, %c0_i32 : i32, i32
  }
  func.func @transform_1(%arg0: i32) -> (i32, i32) {
    %c0_i32 = arith.constant 0 : i32
    %c0_i32_0 = arith.constant 0 : i32
    %c0_i32_1 = arith.constant 0 : i32
    return %c0_i32, %c0_i32_0 : i32, i32
  }
  func.func @transform_2(%arg0: i32) -> (i32, i32) {
    %c0_i32 = arith.constant 0 : i32
    %c0_i32_0 = arith.constant 0 : i32
    %c0_i32_1 = arith.constant 0 : i32
    return %c0_i32, %c0_i32_0 : i32, i32
  }
  func.func @transform_3(%arg0: i32) -> (i32, i32) {
    %c0_i32 = arith.constant 0 : i32
    %c0_i32_0 = arith.constant 0 : i32
    %c0_i32_1 = arith.constant 0 : i32
    return %c0_i32, %c0_i32_0 : i32, i32
  }
  func.func @transform_4(%arg0: i32) -> (i32, i32) {
    %c0_i32 = arith.constant 0 : i32
    %c0_i32_0 = arith.constant 0 : i32
    %c0_i32_1 = arith.constant 0 : i32
    return %c0_i32, %c0_i32_0 : i32, i32
  }
  func.func @transform_5(%arg0: i32) -> (i32, i32) {
    %c0_i32 = arith.constant 0 : i32
    %c0_i32_0 = arith.constant 0 : i32
    %c0_i32_1 = arith.constant 0 : i32
    return %c0_i32, %c0_i32_0 : i32, i32
  }
  func.func @transform_6(%arg0: i32) -> (i32, i32) {
    %c0_i32 = arith.constant 0 : i32
    %c0_i32_0 = arith.constant 0 : i32
    %c0_i32_1 = arith.constant 0 : i32
    return %c0_i32, %c0_i32_0 : i32, i32
  }
  func.func @transform_7(%arg0: i32) -> (i32, i32) {
    %c0_i32 = arith.constant 0 : i32
    %c0_i32_0 = arith.constant 0 : i32
    return %arg0, %c0_i32 : i32, i32
  }
}

module attributes {stable_mosaic.version = 11 : i64} {
  func.func @_mlp_kernel(%arg0: i32, %arg1: memref<16x32xf32, #tpu.memory_space<vmem>>, %arg2: memref<32x32xbf16, #tpu.memory_space<vmem>>, %arg3: memref<1x32xf32, #tpu.memory_space<vmem>>, %arg4: memref<32x32xbf16, #tpu.memory_space<vmem>>, %arg5: memref<1x32xf32, #tpu.memory_space<vmem>>, %arg6: memref<1x32xbf16, #tpu.memory_space<vmem>>, %arg7: memref<1x1xf32, #tpu.memory_space<vmem>>, %arg8: memref<16x1xf32, #tpu.memory_space<vmem>>) attributes {dimension_semantics = [#tpu.dimension_semantics<parallel>], iteration_bounds = array<i64: 2>, scalar_prefetch = 0 : i64, scratch_operands = 0 : i64, tpu.core_type = #tpu.core_type<tc>, window_params = [{transform_indices = @transform_0, window_bounds = array<i64: 16, 32>}, {pipeline_mode = #tpu.pipeline_mode<synchronous>, transform_indices = @transform_1, window_bounds = array<i64: 32, 32>}, {pipeline_mode = #tpu.pipeline_mode<synchronous>, transform_indices = @transform_2, window_bounds = array<i64: 1, 32>}, {pipeline_mode = #tpu.pipeline_mode<synchronous>, transform_indices = @transform_3, window_bounds = array<i64: 32, 32>}, {pipeline_mode = #tpu.pipeline_mode<synchronous>, transform_indices = @transform_4, window_bounds = array<i64: 1, 32>}, {pipeline_mode = #tpu.pipeline_mode<synchronous>, transform_indices = @transform_5, window_bounds = array<i64: 1, 32>}, {pipeline_mode = #tpu.pipeline_mode<synchronous>, transform_indices = @transform_6, window_bounds = array<i64: 1, 1>}, {transform_indices = @transform_7, window_bounds = array<i64: 16, 1>}]} {
    %c0 = arith.constant 0 : index
    %c0_0 = arith.constant 0 : index
    %0 = vector.load %arg1[%c0, %c0_0] : memref<16x32xf32, #tpu.memory_space<vmem>>, vector<16x32xf32>
    %1 = arith.truncf %0 : vector<16x32xf32> to vector<16x32xbf16>
    %c0_1 = arith.constant 0 : index
    %c0_2 = arith.constant 0 : index
    %2 = vector.load %arg2[%c0_1, %c0_2] : memref<32x32xbf16, #tpu.memory_space<vmem>>, vector<32x32xbf16>
    %cst = arith.constant dense<0.000000e+00> : vector<16x32xf32>
    %3 = tpu.matmul %1, %2, %cst {dimension_numbers = #tpu.dot_dimension_numbers<[1], [0], [0], [1], [0, 0, 1, 1], [], []>} : vector<16x32xbf16>, vector<32x32xbf16>, vector<16x32xf32> -> vector<16x32xf32>
    %c0_3 = arith.constant 0 : index
    %c0_4 = arith.constant 0 : index
    %4 = vector.load %arg3[%c0_3, %c0_4] : memref<1x32xf32, #tpu.memory_space<vmem>>, vector<1x32xf32>
    %5 = vector.broadcast %4 : vector<1x32xf32> to vector<16x32xf32>
    %6 = arith.addf %3, %5 : vector<16x32xf32>
    %cst_5 = arith.constant 0.000000e+00 : f32
    %7 = vector.broadcast %cst_5 : f32 to vector<16x32xf32>
    %8 = arith.maximumf %6, %7 : vector<16x32xf32>
    %9 = arith.truncf %8 : vector<16x32xf32> to vector<16x32xbf16>
    %c0_6 = arith.constant 0 : index
    %c0_7 = arith.constant 0 : index
    %10 = vector.load %arg4[%c0_6, %c0_7] : memref<32x32xbf16, #tpu.memory_space<vmem>>, vector<32x32xbf16>
    %cst_8 = arith.constant dense<0.000000e+00> : vector<16x32xf32>
    %11 = tpu.matmul %9, %10, %cst_8 {dimension_numbers = #tpu.dot_dimension_numbers<[1], [0], [0], [1], [0, 0, 1, 1], [], []>} : vector<16x32xbf16>, vector<32x32xbf16>, vector<16x32xf32> -> vector<16x32xf32>
    %c0_9 = arith.constant 0 : index
    %c0_10 = arith.constant 0 : index
    %12 = vector.load %arg5[%c0_9, %c0_10] : memref<1x32xf32, #tpu.memory_space<vmem>>, vector<1x32xf32>
    %13 = vector.broadcast %12 : vector<1x32xf32> to vector<16x32xf32>
    %14 = arith.addf %11, %13 : vector<16x32xf32>
    %cst_11 = arith.constant 0.000000e+00 : f32
    %15 = vector.broadcast %cst_11 : f32 to vector<16x32xf32>
    %16 = arith.maximumf %14, %15 : vector<16x32xf32>
    %c0_12 = arith.constant 0 : index
    %c0_13 = arith.constant 0 : index
    %17 = vector.load %arg6[%c0_12, %c0_13] : memref<1x32xbf16, #tpu.memory_space<vmem>>, vector<1x32xbf16>
    %18 = arith.extf %17 : vector<1x32xbf16> to vector<1x32xf32>
    %19 = vector.broadcast %18 : vector<1x32xf32> to vector<16x32xf32>
    %20 = arith.mulf %16, %19 : vector<16x32xf32>
    %cst_14 = arith.constant dense<0.000000e+00> : vector<16xf32>
    %21 = vector.multi_reduction <add>, %20, %cst_14 [1] : vector<16x32xf32> to vector<16xf32>
    %22 = vector.shape_cast %21 : vector<16xf32> to vector<16x1xf32>
    %c0_15 = arith.constant 0 : index
    %c0_16 = arith.constant 0 : index
    %23 = vector.load %arg7[%c0_15, %c0_16] : memref<1x1xf32, #tpu.memory_space<vmem>>, vector<1x1xf32>
    %24 = vector.broadcast %23 : vector<1x1xf32> to vector<16x1xf32>
    %25 = arith.addf %22, %24 : vector<16x1xf32>
    %c0_17 = arith.constant 0 : index
    %c0_18 = arith.constant 0 : index
    %26 = vector.load %arg8[%c0_17, %c0_18] : memref<16x1xf32, #tpu.memory_space<vmem>>, vector<16x1xf32>
    tpu.vector_store %arg8[%c0_17, %c0_18], %25 {strides = array<i32>} : memref<16x1xf32, #tpu.memory_space<vmem>>, vector<16x1xf32>,
    return
  }
  func.func @transform_0(%arg0: i32) -> (i32, i32) {
    %c0_i32 = arith.constant 0 : i32
    %c0_i32_0 = arith.constant 0 : i32
    return %arg0, %c0_i32 : i32, i32
  }
  func.func @transform_1(%arg0: i32) -> (i32, i32) {
    %c0_i32 = arith.constant 0 : i32
    %c0_i32_0 = arith.constant 0 : i32
    %c0_i32_1 = arith.constant 0 : i32
    return %c0_i32, %c0_i32_0 : i32, i32
  }
  func.func @transform_2(%arg0: i32) -> (i32, i32) {
    %c0_i32 = arith.constant 0 : i32
    %c0_i32_0 = arith.constant 0 : i32
    %c0_i32_1 = arith.constant 0 : i32
    return %c0_i32, %c0_i32_0 : i32, i32
  }
  func.func @transform_3(%arg0: i32) -> (i32, i32) {
    %c0_i32 = arith.constant 0 : i32
    %c0_i32_0 = arith.constant 0 : i32
    %c0_i32_1 = arith.constant 0 : i32
    return %c0_i32, %c0_i32_0 : i32, i32
  }
  func.func @transform_4(%arg0: i32) -> (i32, i32) {
    %c0_i32 = arith.constant 0 : i32
    %c0_i32_0 = arith.constant 0 : i32
    %c0_i32_1 = arith.constant 0 : i32
    return %c0_i32, %c0_i32_0 : i32, i32
  }
  func.func @transform_5(%arg0: i32) -> (i32, i32) {
    %c0_i32 = arith.constant 0 : i32
    %c0_i32_0 = arith.constant 0 : i32
    %c0_i32_1 = arith.constant 0 : i32
    return %c0_i32, %c0_i32_0 : i32, i32
  }
  func.func @transform_6(%arg0: i32) -> (i32, i32) {
    %c0_i32 = arith.constant 0 : i32
    %c0_i32_0 = arith.constant 0 : i32
    %c0_i32_1 = arith.constant 0 : i32
    return %c0_i32, %c0_i32_0 : i32, i32
  }
  func.func @transform_7(%arg0: i32) -> (i32, i32) {
    %c0_i32 = arith.constant 0 : i32
    %c0_i32_0 = arith.constant 0 : i32
    return %arg0, %c0_i32 : i32, i32
  }
}

</mosaic_0001>

<llo_original>
// kernel: tpu_custom_call.1
$region0: #{tpu_custom_call.1}
  #allocation0 [shape = 'u32[]', space=smem, size = 0x4, offset = 0x4, fixed_abs, tag = 'smem constant byte address 0x4 - core index']
  #allocation1 [shape = 'u32[144,128]{1,0:T(1,128)}', space=vmem, size = 0x12000, scoped, tag = 'internal scratch']
  #allocation2 [shape = 'f32[1,1]{1,0:T(1,128)S(1)}', space=vmem, size = 0x200, scoped, tag = 'scoped memory for tpu_custom_call.1']
  %s0 = inlined_call_operand.hbm [shape: f32[24,32], index: 0, kind: input, shape index: {}]
  %s1 = inlined_call_operand.hbm [shape: bf16[32,32], index: 1, kind: input, shape index: {}]
  %s2 = inlined_call_operand.vmem [shape: f32[1,32], index: 2, kind: input, shape index: {}]
  %s3 = inlined_call_operand.hbm [shape: bf16[32,32], index: 3, kind: input, shape index: {}]
  %s4 = inlined_call_operand.vmem [shape: f32[1,32], index: 4, kind: input, shape index: {}]
  %s5 = inlined_call_operand.vmem [shape: bf16[1,32], index: 5, kind: input, shape index: {}]
  %s6 = inlined_call_operand.<no memory space> [shape: f32[1,1], index: 6, kind: input, shape index: {}]
  %s7 = inlined_call_operand.vmem [shape: f32[24,1], index: 7, kind: output, shape index: {}]
  %s8 = sld [smem:[#allocation0]]
  $region121: #{tpu_custom_call.1} parent=0
    _
  %s10 = ssub.s32 1, %s8
  %s11 = scalar_select 0, %s10, %s8
  %v12 = vstv %s6
  %13 = vst [vmem:[#allocation2] sm:$0x1] %v12
  $region1: #{tpu_custom_call.1} parent=0
    #allocation3 [shape = 'u8[16384]{0}', space=vmem, size = 0x4000, scoped, tag = 'input window, operand 0']
    #allocation4 [shape = 's32[2]{0}', space=sflag, size = 0x8, scoped, tag = 'scoped memory for tpu_custom_call.1']
    #allocation5 [shape = 'u8[8192]{0}', space=vmem, size = 0x2000, scoped, tag = 'input window, operand 1, single buffered']
    #allocation6 [shape = 's32[1]{0}', space=sflag, size = 0x4, scoped, tag = 'scoped memory for tpu_custom_call.1']
    #allocation7 [shape = 'u8[8192]{0}', space=vmem, size = 0x2000, scoped, tag = 'input window, operand 3, single buffered']
    #allocation8 [shape = 'u8[16384]{0}', space=vmem, size = 0x4000, scoped, tag = 'output window, operand 0']
    %14 = vsyncpa [#allocation4], 0
    %s15 = scalar_lea.sflag [#allocation4], 1
    %16 = vsyncpa %s15, 0
    %17 = vsyncpa [#allocation6], 0
    loop: start=0, step=1, limit=4
    $region2: #{tpu_custom_call.1} parent=1 // loop_pre_header
      _
    $region3: #{tpu_custom_call.1} parent=1 // loop_header
      %s19 = sphi 0, %s23
      %p20 = scmp.ge.s32.totalorder %s19, 4
      %s29 = sphi 0, %s31
      %s32 = sphi 0, %s29
      %s33 = sphi 0, %s32
      %s49 = sphi 0, %s33
      %s53 = sphi 0, %s53
      %s55 = sphi 0, %s53
      %s56 = sphi 0, %s55
      %s70 = sphi 0, %s56
      %s74 = sphi 0, %s74
      %s76 = sphi 0, %s74
      %s77 = sphi 0, %s76
      %s91 = sphi 0, %s77
      %s95 = sphi 0, %s95
      %s97 = sphi 0, %s95
      %s98 = sphi 0, %s97
      %s112 = sphi 0, %s98
      %s116 = sphi 0, %s116
      %s118 = sphi 0, %s116
      %s119 = sphi 0, %s118
      %s133 = sphi 0, %s119
      %s137 = sphi 0, %s137
      %s139 = sphi 0, %s137
      %s140 = sphi 0, %s139
      %s154 = sphi 0, %s140
      %s158 = sphi 0, %s158
      %s160 = sphi 0, %s158
      %s161 = sphi 0, %s160
      %s175 = sphi 0, %s161
      %s181 = sphi 0, %s183
      %s184 = sphi 0, %s181
      %s185 = sphi 0, %s184
      %s201 = sphi 0, %s185
    $region4: #{tpu_custom_call.1} parent=1 // loop_header_branch
      %22 = sbr.rel (%p20) target = $region8
    $region5: #{tpu_custom_call.1} parent=1 // loop_body
      %s24 = ssub.s32 %s19, 1
      %s25 = ssub.s32 %s19, 2
      %s26 = sadd.s32 %s19, 1
      %s27 = ssub.s32 %s19, %s26
      %p28 = scmp.eq.s32.totalorder %s27, 0
      %s30 = sadd.s32 %s29, 1
      %s31 = scalar_select %p28, %s29, %s30
      %p34 = pneg %p28
      %p35 = scmp.eq.s32.totalorder %s19, 1
      %p36 = por %p34, %p35
      %p37 = scmp.ne.s32.totalorder %s29, %s32
      %p38 = scmp.eq.s32.totalorder %s19, 0
      %p39 = por %p37, %p38
      %p40 = scmp.ne.s32.totalorder %s29, %s32
      %p41 = scmp.eq.s32.totalorder %s24, 1
      %p42 = por %p40, %p41
      %p43 = scmp.ne.s32.totalorder %s32, %s33
      %p44 = scmp.eq.s32.totalorder %s24, 0
      %p45 = por %p43, %p44
      %p46 = scmp.ne.s32.totalorder %s32, %s33
      %p47 = scmp.eq.s32.totalorder %s25, 1
      %p48 = por %p46, %p47
      %p50 = scmp.ne.s32.totalorder %s33, %s49
      %p51 = scmp.eq.s32.totalorder %s25, 0
      %p52 = por %p50, %p51
      %s54 = sadd.s32 %s53, 1
      %p57 = scmp.eq.s32.totalorder %s19, 1
      %p58 = scmp.ne.s32.totalorder %s53, %s55
      %p59 = scmp.eq.s32.totalorder %s19, 0
      %p60 = por %p58, %p59
      %p61 = scmp.ne.s32.totalorder %s53, %s55
      %p62 = scmp.eq.s32.totalorder %s24, 1
      %p63 = por %p61, %p62
      %p64 = scmp.ne.s32.totalorder %s55, %s56
      %p65 = scmp.eq.s32.totalorder %s24, 0
      %p66 = por %p64, %p65
      %p67 = scmp.ne.s32.totalorder %s55, %s56
      %p68 = scmp.eq.s32.totalorder %s25, 1
      %p69 = por %p67, %p68
      %p71 = scmp.ne.s32.totalorder %s56, %s70
      %p72 = scmp.eq.s32.totalorder %s25, 0
      %p73 = por %p71, %p72
      %s75 = sadd.s32 %s74, 1
      %p78 = scmp.eq.s32.totalorder %s19, 1
      %p79 = scmp.ne.s32.totalorder %s74, %s76
      %p80 = scmp.eq.s32.totalorder %s19, 0
      %p81 = por %p79, %p80
      %p82 = scmp.ne.s32.totalorder %s74, %s76
      %p83 = scmp.eq.s32.totalorder %s24, 1
      %p84 = por %p82, %p83
      %p85 = scmp.ne.s32.totalorder %s76, %s77
      %p86 = scmp.eq.s32.totalorder %s24, 0
      %p87 = por %p85, %p86
      %p88 = scmp.ne.s32.totalorder %s76, %s77
      %p89 = scmp.eq.s32.totalorder %s25, 1
      %p90 = por %p88, %p89
      %p92 = scmp.ne.s32.totalorder %s77, %s91
      %p93 = scmp.eq.s32.totalorder %s25, 0
      %p94 = por %p92, %p93
      %s96 = sadd.s32 %s95, 1
      %p99 = scmp.eq.s32.totalorder %s19, 1
      %p100 = scmp.ne.s32.totalorder %s95, %s97
      %p101 = scmp.eq.s32.totalorder %s19, 0
      %p102 = por %p100, %p101
      %p103 = scmp.ne.s32.totalorder %s95, %s97
      %p104 = scmp.eq.s32.totalorder %s24, 1
      %p105 = por %p103, %p104
      %p106 = scmp.ne.s32.totalorder %s97, %s98
      %p107 = scmp.eq.s32.totalorder %s24, 0
      %p108 = por %p106, %p107
      %p109 = scmp.ne.s32.totalorder %s97, %s98
      %p110 = scmp.eq.s32.totalorder %s25, 1
      %p111 = por %p109, %p110
      %p113 = scmp.ne.s32.totalorder %s98, %s112
      %p114 = scmp.eq.s32.totalorder %s25, 0
      %p115 = por %p113, %p114
      %s117 = sadd.s32 %s116, 1
      %p120 = scmp.eq.s32.totalorder %s19, 1
      %p121 = scmp.ne.s32.totalorder %s116, %s118
      %p122 = scmp.eq.s32.totalorder %s19, 0
      %p123 = por %p121, %p122
      %p124 = scmp.ne.s32.totalorder %s116, %s118
      %p125 = scmp.eq.s32.totalorder %s24, 1
      %p126 = por %p124, %p125
      %p127 = scmp.ne.s32.totalorder %s118, %s119
      %p128 = scmp.eq.s32.totalorder %s24, 0
      %p129 = por %p127, %p128
      %p130 = scmp.ne.s32.totalorder %s118, %s119
      %p131 = scmp.eq.s32.totalorder %s25, 1
      %p132 = por %p130, %p131
      %p134 = scmp.ne.s32.totalorder %s119, %s133
      %p135 = scmp.eq.s32.totalorder %s25, 0
      %p136 = por %p134, %p135
      %s138 = sadd.s32 %s137, 1
      %p141 = scmp.eq.s32.totalorder %s19, 1
      %p142 = scmp.ne.s32.totalorder %s137, %s139
      %p143 = scmp.eq.s32.totalorder %s19, 0
      %p144 = por %p142, %p143
      %p145 = scmp.ne.s32.totalorder %s137, %s139
      %p146 = scmp.eq.s32.totalorder %s24, 1
      %p147 = por %p145, %p146
      %p148 = scmp.ne.s32.totalorder %s139, %s140
      %p149 = scmp.eq.s32.totalorder %s24, 0
      %p150 = por %p148, %p149
      %p151 = scmp.ne.s32.totalorder %s139, %s140
      %p152 = scmp.eq.s32.totalorder %s25, 1
      %p153 = por %p151, %p152
      %p155 = scmp.ne.s32.totalorder %s140, %s154
      %p156 = scmp.eq.s32.totalorder %s25, 0
      %p157 = por %p155, %p156
      %s159 = sadd.s32 %s158, 1
      %p162 = scmp.eq.s32.totalorder %s19, 1
      %p163 = scmp.ne.s32.totalorder %s158, %s160
      %p164 = scmp.eq.s32.totalorder %s19, 0
      %p165 = por %p163, %p164
      %p166 = scmp.ne.s32.totalorder %s158, %s160
      %p167 = scmp.eq.s32.totalorder %s24, 1
      %p168 = por %p166, %p167
      %p169 = scmp.ne.s32.totalorder %s160, %s161
      %p170 = scmp.eq.s32.totalorder %s24, 0
      %p171 = por %p169, %p170
      %p172 = scmp.ne.s32.totalorder %s160, %s161
      %p173 = scmp.eq.s32.totalorder %s25, 1
      %p174 = por %p172, %p173
      %p176 = scmp.ne.s32.totalorder %s161, %s175
      %p177 = scmp.eq.s32.totalorder %s25, 0
      %p178 = por %p176, %p177
      %s179 = ssub.s32 %s19, %s26
      %p180 = scmp.eq.s32.totalorder %s179, 0
      %s182 = sadd.s32 %s181, 1
      %s183 = scalar_select %p180, %s181, %s182
      %p186 = pneg %p180
      %p187 = scmp.eq.s32.totalorder %s19, 1
      %p188 = por %p186, %p187
      %p189 = scmp.ne.s32.totalorder %s181, %s184
      %p190 = scmp.eq.s32.totalorder %s19, 0
      %p191 = por %p189, %p190
      %p192 = scmp.ne.s32.totalorder %s181, %s184
      %p193 = scmp.eq.s32.totalorder %s24, 1
      %p194 = por %p192, %p193
      %p195 = scmp.ne.s32.totalorder %s184, %s185
      %p196 = scmp.eq.s32.totalorder %s24, 0
      %p197 = por %p195, %p196
      %p198 = scmp.ne.s32.totalorder %s184, %s185
      %p199 = scmp.eq.s32.totalorder %s25, 1
      %p200 = por %p198, %p199
      %p202 = scmp.ne.s32.totalorder %s185, %s201
      %p203 = scmp.eq.s32.totalorder %s25, 0
      %p204 = por %p202, %p203
      %p205 = scmp.le.s32.totalorder 1, %s19
      %p206 = scmp.lt.s32.totalorder %s19, 3
      %p207 = pnand %p205, %p206
      %p208 = pneg %p207
      // Predicated region
      $region9: #{tpu_custom_call.1} parent=5 // pred_check
        _
      $region10: #{tpu_custom_call.1} parent=5 // pred_check_branch
        %210 = sbr.rel (%p207) target = $region12
      $region11: #{tpu_custom_call.1} parent=5 // pred_region
        %s211 = ssub.s32 %s19, 1
        // Predicated region
        $region13: #{tpu_custom_call.1} parent=11 // pred_check
          %p212 = pneg %p66
        $region14: #{tpu_custom_call.1} parent=11 // pred_check_branch
          %214 = sbr.rel (%p212) target = $region16
        $region15: #{tpu_custom_call.1} parent=11 // pred_region
          %s216 = ssub.s32 256, 256
          %217 = vsyncadd [#allocation6], %s216
          %s218 = sshll.u32 [#allocation5], 4
          %s219 = int_to_ptr.vmem [resolvable:$true] %s218
          %224 = dma.hbm_to_vmem [thread:$0]  %s1, 256, %s219, [#allocation6], 64, 64, 4
        $region16: #{tpu_custom_call.1} parent=11 // pred_fallthru
          _
        // Predicated region
        $region17: #{tpu_custom_call.1} parent=11 // pred_check
          %p225 = pneg %p87
        $region18: #{tpu_custom_call.1} parent=11 // pred_check_branch
          %227 = sbr.rel (%p225) target = $region20
        $region19: #{tpu_custom_call.1} parent=11 // pred_region
          _
        $region20: #{tpu_custom_call.1} parent=11 // pred_fallthru
          _
        // Predicated region
        $region21: #{tpu_custom_call.1} parent=11 // pred_check
          %p228 = pneg %p108
        $region22: #{tpu_custom_call.1} parent=11 // pred_check_branch
          %230 = sbr.rel (%p228) target = $region24
        $region23: #{tpu_custom_call.1} parent=11 // pred_region
          %s232 = ssub.s32 256, 256
          %233 = vsyncadd [#allocation6], %s232
          %s234 = sshll.u32 [#allocation7], 4
          %s235 = int_to_ptr.vmem [resolvable:$true] %s234
          %240 = dma.hbm_to_vmem [thread:$0]  %s3, 256, %s235, [#allocation6], 64, 64, 4
        $region24: #{tpu_custom_call.1} parent=11 // pred_fallthru
          _
        // Predicated region
        $region25: #{tpu_custom_call.1} parent=11 // pred_check
          %p241 = pneg %p129
        $region26: #{tpu_custom_call.1} parent=11 // pred_check_branch
          %243 = sbr.rel (%p241) target = $region28
        $region27: #{tpu_custom_call.1} parent=11 // pred_region
          _
        $region28: #{tpu_custom_call.1} parent=11 // pred_fallthru
          _
        // Predicated region
        $region29: #{tpu_custom_call.1} parent=11 // pred_check
          %p244 = pneg %p150
        $region30: #{tpu_custom_call.1} parent=11 // pred_check_branch
          %246 = sbr.rel (%p244) target = $region32
        $region31: #{tpu_custom_call.1} parent=11 // pred_region
          _
        $region32: #{tpu_custom_call.1} parent=11 // pred_fallthru
          _
        // Predicated region
        $region33: #{tpu_custom_call.1} parent=11 // pred_check
          %p247 = pneg %p171
        $region34: #{tpu_custom_call.1} parent=11 // pred_check_branch
          %249 = sbr.rel (%p247) target = $region36
        $region35: #{tpu_custom_call.1} parent=11 // pred_region
          _
        $region36: #{tpu_custom_call.1} parent=11 // pred_fallthru
          _
      $region12: #{tpu_custom_call.1} parent=5 // pred_fallthru
        _
      %p250 = scmp.lt.s32.totalorder %s19, 2
      // Predicated region
      $region37: #{tpu_custom_call.1} parent=5 // pred_check
        %p251 = pneg %p250
      $region38: #{tpu_custom_call.1} parent=5 // pred_check_branch
        %253 = sbr.rel (%p251) target = $region40
      $region39: #{tpu_custom_call.1} parent=5 // pred_region
        // Predicated region
        $region41: #{tpu_custom_call.1} parent=39 // pred_check
          %p254 = pneg %p39
        $region42: #{tpu_custom_call.1} parent=39 // pred_check_branch
          %256 = sbr.rel (%p254) target = $region44
        $region43: #{tpu_custom_call.1} parent=39 // pred_region
          %s257 = sand.u32 %s29, 1
          %s258 = scalar_lea.sflag [#allocation4], %s257
          %s259 = sand.u32 %s29, 1
          %s260 = smul.addr %s259, 16
          %s261 = scalar_lea.vmem [#allocation3], %s260
          %s262 = smul.u32 2, %s19
          %s263 = ssub.s32 3, %s262
          %p264 = scmp.lt.s32.totalorder %s263, 2
          %s265 = scalar_select %p264, %s263, 2
          %s266 = smul.u32 128, %s265
          %s268 = ssub.s32 256, %s266
          %269 = vsyncadd %s258, %s268
          %p270 = scmp.ne.s32.totalorder 0, %s266
          %s271 = smul.addr %s262, 128
          %s272 = scalar_lea.hbm %s0, %s271
          %s273 = smul.u32 8, %s265
          %s274 = sshll.u32 %s261, 4
          %s275 = int_to_ptr.vmem [resolvable:$true] %s274
          %s276 = sshll.u32 %s273, 4
          %280 = dma.hbm_to_vmem [thread:$0]  (%p270), %s272, %s276, %s275, %s258, 128, 128, 8
        $region44: #{tpu_custom_call.1} parent=39 // pred_fallthru
          _
      $region40: #{tpu_custom_call.1} parent=5 // pred_fallthru
        _
      %p281 = scmp.le.s32.totalorder 1, %s19
      %p282 = scmp.lt.s32.totalorder %s19, 3
      %p283 = pnand %p281, %p282
      %p284 = pneg %p283
      // Predicated region
      $region45: #{tpu_custom_call.1} parent=5 // pred_check
        _
      $region46: #{tpu_custom_call.1} parent=5 // pred_check_branch
        %286 = sbr.rel (%p283) target = $region48
      $region47: #{tpu_custom_call.1} parent=5 // pred_region
        %s287 = ssub.s32 %s19, 1
        %s288 = sand.u32 %s32, 1
        %s289 = scalar_lea.sflag [#allocation4], %s288
        %s290 = sand.u32 %s32, 1
        %s291 = smul.addr %s290, 16
        %s292 = scalar_lea.vmem [#allocation3], %s291
        // Predicated region
        $region49: #{tpu_custom_call.1} parent=47 // pred_check
          %p293 = pneg %p45
        $region50: #{tpu_custom_call.1} parent=47 // pred_check_branch
          %295 = sbr.rel (%p293) target = $region52
        $region51: #{tpu_custom_call.1} parent=47 // pred_region
          %296 = dma.done %s289, 256
        $region52: #{tpu_custom_call.1} parent=47 // pred_fallthru
          _
        // Predicated region
        $region53: #{tpu_custom_call.1} parent=47 // pred_check
          %p297 = pneg %p66
        $region54: #{tpu_custom_call.1} parent=47 // pred_check_branch
          %299 = sbr.rel (%p297) target = $region56
        $region55: #{tpu_custom_call.1} parent=47 // pred_region
          %300 = dma.done [#allocation6], 256
        $region56: #{tpu_custom_call.1} parent=47 // pred_fallthru
          _
        // Predicated region
        $region57: #{tpu_custom_call.1} parent=47 // pred_check
          %p301 = pneg %p108
        $region58: #{tpu_custom_call.1} parent=47 // pred_check_branch
          %303 = sbr.rel (%p301) target = $region60
        $region59: #{tpu_custom_call.1} parent=47 // pred_region
          %304 = dma.done [#allocation6], 256
        $region60: #{tpu_custom_call.1} parent=47 // pred_fallthru
          _
        %s305 = sand.u32 %s32, 1
        %s306 = scalar_lea.sflag [#allocation4], %s305
        %s307 = sand.u32 %s32, 1
        %s308 = smul.addr %s307, 16
        %s309 = scalar_lea.vmem [#allocation3], %s308
        %p310 = pneg %p45
        %p311 = pneg %p42
        %p312 = pneg %p66
        %p313 = pneg %p63
        %p314 = pneg %p87
        %p315 = pneg %p84
        %p316 = pneg %p108
        %p317 = pneg %p105
        %p318 = pneg %p129
        %p319 = pneg %p126
        %p320 = pneg %p150
        %p321 = pneg %p147
        %p322 = pneg %p171
        %p323 = pneg %p168
        %p324 = pneg %p197
        %p325 = pneg %p194
        %s326 = sand.u32 %s184, 1
        %s327 = sand.u32 %s184, 1
        %s328 = smul.addr %s327, 16
        %s329 = scalar_lea.vmem [#allocation8], %s328
        %s330 = smul.u32 2, %s24
        %s331 = ssub.s32 3, %s330
        %p332 = scmp.lt.s32.totalorder %s331, 2
        %s333 = scalar_select %p332, %s331, 2
        %s334 = smul.u32 128, %s333
        %s335 = smul.u32 2, %s24
        %s336 = ssub.s32 3, %s335
        %p337 = scmp.lt.s32.totalorder %s336, 2
        %s338 = scalar_select %p337, %s336, 2
        %s339 = smul.u32 128, %s338
        %v341 = vld [vmem:[%s292] sm:$0xff]
        %v342 = vld [vmem:[%s292 + $0x8] sm:$0xff]
        %v343 = vpack.c.bf16 %v342, %v341
        %v344 = vld [vmem:[#allocation5] sm:$0xf]
        %v345 = vld [vmem:[#allocation5 + $0x4] sm:$0xf]
        %v346 = vld [vmem:[#allocation5 + $0x8] sm:$0xf]
        %v347 = vld [vmem:[#allocation5 + $0xc] sm:$0xf]
        %v348 = vld [vmem:[%s2] sm:$0x1]
        %v350 = vlaneseq
        %v351 = vshrl.u32 %v350, 7
        %v352 = vsub.s32 0, %v351
        %v353 = vrot.slane %v348, %v352
        %v359 = vunpack.c.l.b16 %v344
        %v360 = vunpack.c.l.b16 %v345
        %v361 = vunpack.c.l.b16 %v346
        %v362 = vunpack.c.l.b16 %v347
        %v363 = vpack.c.b16 %v360, %v359
        %v364 = vpack.c.b16 %v362, %v361
        %vm367 = vcmask 261120
        %v369 = vsel %vm367, %v343, 0
        %371 = vmatprep.subr.bf16.mxu0 0
        %372 = vmatpush1.bf16.msra.mxu0 %v363
        %373 = vmatprep.subr.bf16.mxu0 0
        %374 = vmatpush1.bf16.msra.mxu0 %v364
        %375 = vmatprep.subr.bf16.mxu0 0
        %376 = vmatpush1.bf16.msra.mxu0 0
        %377 = vmatprep.subr.bf16.mxu0 0
        %378 = vmatpush1.bf16.msra.mxu0 0
        %379 = vmatprep.subr.bf16.mxu0 0
        %380 = vmatpush1.bf16.msra.mxu0 0
        %381 = vmatprep.subr.bf16.mxu0 0
        %382 = vmatpush1.bf16.msra.mxu0 0
        %383 = vmatprep.subr.bf16.mxu0 0
        %384 = vmatpush1.bf16.msra.mxu0 0
        %385 = vmatprep.subr.bf16.mxu0 0
        %386 = vmatpush1.bf16.msra.mxu0 0
        %387 = vmatprep.subr.bf16.mxu0 0
        %388 = vmatpush1.bf16.msra.mxu0 0
        %389 = vmatprep.subr.bf16.mxu0 0
        %390 = vmatpush1.bf16.msra.mxu0 0
        %391 = vmatprep.subr.bf16.mxu0 0
        %392 = vmatpush1.bf16.msra.mxu0 0
        %393 = vmatprep.subr.bf16.mxu0 0
        %394 = vmatpush1.bf16.msra.mxu0 0
        %395 = vmatprep.subr.bf16.mxu0 0
        %396 = vmatpush1.bf16.msra.mxu0 0
        %397 = vmatprep.subr.bf16.mxu0 0
        %398 = vmatpush1.bf16.msra.mxu0 0
        %399 = vmatprep.subr.bf16.mxu0 0
        %400 = vmatpush1.bf16.msra.mxu0 0
        %401 = vmatprep.subr.bf16.mxu0 0
        %402 = vmatpush1.bf16.msra.mxu0 0
        %403 = vmatprep.mubr.bf16.mxu0 0
        %404 = vmatmul.mubr.bf16.gmra.mrb[0].mxu0 %v369
        %v405 = vpop.f32.mrb[0].mxu0
        %v406 = vadd.f32 %v353, %v405
        %v407 = vpop.f32.mrb[0].mxu0
        %v408 = vpop.f32.mrb[0].mxu0
        %v409 = vadd.f32 %v353, %v408
        %v410 = vpop.f32.mrb[0].mxu0
        %411 = vdwg.mxu0
        %v412 = vmax.f32 %v406, 0.0
        %v413 = vmax.f32 %v409, 0.0
        %v414 = vpack.c.bf16 %v413, %v412
        %v415 = vld [vmem:[#allocation7] sm:$0xf]
        %v416 = vld [vmem:[#allocation7 + $0x4] sm:$0xf]
        %v417 = vld [vmem:[#allocation7 + $0x8] sm:$0xf]
        %v418 = vld [vmem:[#allocation7 + $0xc] sm:$0xf]
        %v419 = vld [vmem:[%s4] sm:$0x1]
        %v421 = vlaneseq
        %v422 = vshrl.u32 %v421, 7
        %v423 = vsub.s32 0, %v422
        %v424 = vrot.slane %v419, %v423
        %v430 = vunpack.c.l.b16 %v415
        %v431 = vunpack.c.l.b16 %v416
        %v432 = vunpack.c.l.b16 %v417
        %v433 = vunpack.c.l.b16 %v418
        %v434 = vpack.c.b16 %v431, %v430
        %v435 = vpack.c.b16 %v433, %v432
        %v439 = vsel %vm367, %v414, 0
        %441 = vmatprep.subr.bf16.mxu0 0
        %442 = vmatpush1.bf16.msra.mxu0 %v434
        %443 = vmatprep.subr.bf16.mxu0 0
        %444 = vmatpush1.bf16.msra.mxu0 %v435
        %445 = vmatprep.subr.bf16.mxu0 0
        %446 = vmatpush1.bf16.msra.mxu0 0
        %447 = vmatprep.subr.bf16.mxu0 0
        %448 = vmatpush1.bf16.msra.mxu0 0
        %449 = vmatprep.subr.bf16.mxu0 0
        %450 = vmatpush1.bf16.msra.mxu0 0
        %451 = vmatprep.subr.bf16.mxu0 0
        %452 = vmatpush1.bf16.msra.mxu0 0
        %453 = vmatprep.subr.bf16.mxu0 0
        %454 = vmatpush1.bf16.msra.mxu0 0
        %455 = vmatprep.subr.bf16.mxu0 0
        %456 = vmatpush1.bf16.msra.mxu0 0
        %457 = vmatprep.subr.bf16.mxu0 0
        %458 = vmatpush1.bf16.msra.mxu0 0
        %459 = vmatprep.subr.bf16.mxu0 0
        %460 = vmatpush1.bf16.msra.mxu0 0
        %461 = vmatprep.subr.bf16.mxu0 0
        %462 = vmatpush1.bf16.msra.mxu0 0
        %463 = vmatprep.subr.bf16.mxu0 0
        %464 = vmatpush1.bf16.msra.mxu0 0
        %465 = vmatprep.subr.bf16.mxu0 0
        %466 = vmatpush1.bf16.msra.mxu0 0
        %467 = vmatprep.subr.bf16.mxu0 0
        %468 = vmatpush1.bf16.msra.mxu0 0
        %469 = vmatprep.subr.bf16.mxu0 0
        %470 = vmatpush1.bf16.msra.mxu0 0
        %471 = vmatprep.subr.bf16.mxu0 0
        %472 = vmatpush1.bf16.msra.mxu0 0
        %473 = vmatprep.mubr.bf16.mxu0 0
        %474 = vmatmul.mubr.bf16.gmra.mrb[0].mxu0 %v439
        %v475 = vpop.f32.mrb[0].mxu0
        %v476 = vadd.f32 %v424, %v475
        %v477 = vpop.f32.mrb[0].mxu0
        %v478 = vpop.f32.mrb[0].mxu0
        %v479 = vadd.f32 %v424, %v478
        %v480 = vpop.f32.mrb[0].mxu0
        %481 = vdwg.mxu0
        %v482 = vmax.f32 %v476, 0.0
        %v483 = vmax.f32 %v479, 0.0
        %v484 = vld [vmem:[%s5] sm:$0x1]
        %v485 = vunpack.c.l.bf16 %v484
        %v486 = vlaneseq
        %v487 = vshrl.u32 %v486, 7
        %v488 = vsub.s32 0, %v487
        %v489 = vrot.slane %v485, %v488
        %v490 = vmul.f32 %v482, %v489
        %v491 = vmul.f32 %v483, %v489
        %v492 = vsel %vm367, %v490, 0.0
        %493 = vadd.xlane.f32.xlu0 %v492
        %v494 = vpop.xlane.xlu0 %493
        %v495 = vsel %vm367, %v491, 0.0
        %496 = vadd.xlane.f32.xlu0 %v495
        %v497 = vpop.xlane.xlu0 %496
        %v498 = vld [vmem:[#allocation2] sm:$0x1]
        %v500 = vlaneseq
        %v501 = vshrl.u32 %v500, 7
        %v502 = vsub.s32 0, %v501
        %v503 = vrot.slane %v498, %v502
        %v505 = vadd.f32 %v494, %v503
        %v506 = vadd.f32 %v497, %v503
        %vm507 = vcmask 7168
        %508 = vst.msk [vmem:[%s329] sm:$0xff] %vm507, %v505
        %509 = vst.msk [vmem:[%s329 + $0x8] sm:$0xff] %vm507, %v506
        %s510 = sand.u32 %s184, 1
        %s511 = sand.u32 %s184, 1
        %s512 = smul.addr %s511, 16
        %s513 = scalar_lea.vmem [#allocation8], %s512
        // Predicated region
        $region61: #{tpu_custom_call.1} parent=47 // pred_check
          %p514 = pneg %p194
        $region62: #{tpu_custom_call.1} parent=47 // pred_check_branch
          %516 = sbr.rel (%p514) target = $region64
        $region63: #{tpu_custom_call.1} parent=47 // pred_region
          %s517 = smul.u32 2, %s24
          %s518 = ssub.s32 3, %s517
          %p519 = scmp.lt.s32.totalorder %s518, 2
          %s520 = scalar_select %p519, %s518, 2
          %s521 = smul.u32 128, %s520
          %p522 = scmp.ne.s32.totalorder 0, %s521
          %s523 = smul.addr %s517, 8
          %s524 = scalar_lea.vmem %s7, %s523
          // Predicated region
          $region65: #{tpu_custom_call.1} parent=63 // pred_check
            %p525 = pneg %p522
          $region66: #{tpu_custom_call.1} parent=63 // pred_check_branch
            %527 = sbr.rel (%p525) target = $region68
          $region67: #{tpu_custom_call.1} parent=63 // pred_region
            // Predicated region
            $region69: #{tpu_custom_call.1} parent=67 // pred_check
              _
            $region70: #{tpu_custom_call.1} parent=67 // pred_check_branch
              %529 = sbr.rel (0) target = $region72
            $region71: #{tpu_custom_call.1} parent=67 // pred_region
              // Predicated region
              $region91: #{tpu_custom_call.1} parent=71 // pred_check
                _
              $region92: #{tpu_custom_call.1} parent=71 // pred_check_branch
                %580 = sbr.rel (0) target = $region94
              $region93: #{tpu_custom_call.1} parent=71 // pred_region
                %s581 = sshrl.u32 %s520, 1
                // While loop
                $region95: #{tpu_custom_call.1} parent=93 // loop_pre_header
                  _
                $region96: #{tpu_custom_call.1} parent=93 // loop_header
                  %s583 = sphi 0, %s585
                  %p584 = scmp.ge.s32.totalorder %s583, %s581
                  %s588 = sphi 0, %s597
                  %s589 = sphi %s513, %s600
                  %s590 = sphi %s524, %s601
                $region97: #{tpu_custom_call.1} parent=93 // loop_header_branch
                  %587 = sbr.rel (%p584) target = $region101
                $region98: #{tpu_custom_call.1} parent=93 // loop_body
                  %v591 = vld [vmem:[%s589] sm:$0xff]
                  %592 = vst [vmem:[%s590] sm:$0xff] %v591
                  %v593 = vld [vmem:[%s589 + $0x8] sm:$0xff]
                  %594 = vst [vmem:[%s590 + $0x8] sm:$0xff] %v593
                  %s595 = sadd.s32 1, %s588
                  %p596 = scmp.ge.s32.totalorder %s595, %s581
                  %s597 = scalar_select %p596, 0, %s595
                  %s598 = smul.u32 %s597, 16
                  %s599 = smul.u32 %s597, 16
                  %s600 = scalar_lea.vmem %s513, %s598 [#allocation8]
                  %s601 = scalar_lea.vmem %s524, %s599
                $region99: #{tpu_custom_call.1} parent=93 // loop_footer
                  %s585 = sadd.s32 %s583, 1
                $region100: #{tpu_custom_call.1} parent=93 // loop_footer_branch
                  %582 = sbr.rel target = $region96
                $region101: #{tpu_custom_call.1} parent=93 // loop_exit
                  _
                %s602 = sshrl.u32 %s520, 1
                %s603 = sand.u32 %s520, 1
                %s604 = smul.u32 %s602, 2
                %s605 = smul.u32 8, %s604
                %s606 = scalar_lea.vmem %s513, %s605 [#allocation8]
                %s607 = smul.u32 8, %s604
                %s608 = scalar_lea.vmem %s524, %s607
                // While loop
                $region102: #{tpu_custom_call.1} parent=93 // loop_pre_header
                  _
                $region103: #{tpu_custom_call.1} parent=93 // loop_header
                  %s610 = sphi 0, %s612
                  %p611 = scmp.ge.s32.totalorder %s610, %s603
                  %s615 = sphi 0, %s622
                  %s616 = sphi %s606, %s625
                  %s617 = sphi %s608, %s626
                $region104: #{tpu_custom_call.1} parent=93 // loop_header_branch
                  %614 = sbr.rel (%p611) target = $region108
                $region105: #{tpu_custom_call.1} parent=93 // loop_body
                  %v618 = vld [vmem:[%s616] sm:$0xff]
                  %619 = vst [vmem:[%s617] sm:$0xff] %v618
                  %s620 = sadd.s32 1, %s615
                  %p621 = scmp.ge.s32.totalorder %s620, %s603
                  %s622 = scalar_select %p621, 0, %s620
                  %s623 = smul.u32 %s622, 8
                  %s624 = smul.u32 %s622, 8
                  %s625 = scalar_lea.vmem %s606, %s623 [#allocation8]
                  %s626 = scalar_lea.vmem %s608, %s624
                $region106: #{tpu_custom_call.1} parent=93 // loop_footer
                  %s612 = sadd.s32 %s610, 1
                $region107: #{tpu_custom_call.1} parent=93 // loop_footer_branch
                  %609 = sbr.rel target = $region103
                $region108: #{tpu_custom_call.1} parent=93 // loop_exit
                  _
              $region94: #{tpu_custom_call.1} parent=71 // pred_fallthru
                _
              // Predicated region
              $region109: #{tpu_custom_call.1} parent=71 // pred_check
                _
              $region110: #{tpu_custom_call.1} parent=71 // pred_check_branch
                %628 = sbr.rel target = $region112
              $region111: #{tpu_custom_call.1} parent=71 // pred_region
                _
              $region112: #{tpu_custom_call.1} parent=71 // pred_fallthru
                _
            $region72: #{tpu_custom_call.1} parent=67 // pred_fallthru
              _
            // Predicated region
            $region73: #{tpu_custom_call.1} parent=67 // pred_check
              _
            $region74: #{tpu_custom_call.1} parent=67 // pred_check_branch
              %531 = sbr.rel target = $region76
            $region75: #{tpu_custom_call.1} parent=67 // pred_region
              %s533 = sshrl.u32 %s520, 1
              // While loop
              $region77: #{tpu_custom_call.1} parent=75 // loop_pre_header
                _
              $region78: #{tpu_custom_call.1} parent=75 // loop_header
                %s535 = sphi 0, %s537
                %p536 = scmp.ge.s32.totalorder %s535, %s533
                %s540 = sphi 0, %s549
                %s541 = sphi %s513, %s552
                %s542 = sphi %s524, %s553
              $region79: #{tpu_custom_call.1} parent=75 // loop_header_branch
                %539 = sbr.rel (%p536) target = $region83
              $region80: #{tpu_custom_call.1} parent=75 // loop_body
                %v543 = vld [vmem:[%s541] sm:$0xff]
                %544 = vst [vmem:[%s542] sm:$0xff] %v543
                %v545 = vld [vmem:[%s541 + $0x8] sm:$0xff]
                %546 = vst [vmem:[%s542 + $0x8] sm:$0xff] %v545
                %s547 = sadd.s32 1, %s540
                %p548 = scmp.ge.s32.totalorder %s547, %s533
                %s549 = scalar_select %p548, 0, %s547
                %s550 = smul.u32 %s549, 16
                %s551 = smul.u32 %s549, 16
                %s552 = scalar_lea.vmem %s513, %s550 [#allocation8]
                %s553 = scalar_lea.vmem %s524, %s551
              $region81: #{tpu_custom_call.1} parent=75 // loop_footer
                %s537 = sadd.s32 %s535, 1
              $region82: #{tpu_custom_call.1} parent=75 // loop_footer_branch
                %534 = sbr.rel target = $region78
              $region83: #{tpu_custom_call.1} parent=75 // loop_exit
                _
              %s554 = sshrl.u32 %s520, 1
              %s555 = sand.u32 %s520, 1
              %s556 = smul.u32 %s554, 2
              %s557 = smul.u32 8, %s556
              %s558 = scalar_lea.vmem %s513, %s557 [#allocation8]
              %s559 = smul.u32 8, %s556
              %s560 = scalar_lea.vmem %s524, %s559
              // While loop
              $region84: #{tpu_custom_call.1} parent=75 // loop_pre_header
                _
              $region85: #{tpu_custom_call.1} parent=75 // loop_header
                %s562 = sphi 0, %s564
                %p563 = scmp.ge.s32.totalorder %s562, %s555
                %s567 = sphi 0, %s574
                %s568 = sphi %s558, %s577
                %s569 = sphi %s560, %s578
              $region86: #{tpu_custom_call.1} parent=75 // loop_header_branch
                %566 = sbr.rel (%p563) target = $region90
              $region87: #{tpu_custom_call.1} parent=75 // loop_body
                %v570 = vld [vmem:[%s568] sm:$0xff]
                %571 = vst [vmem:[%s569] sm:$0xff] %v570
                %s572 = sadd.s32 1, %s567
                %p573 = scmp.ge.s32.totalorder %s572, %s555
                %s574 = scalar_select %p573, 0, %s572
                %s575 = smul.u32 %s574, 8
                %s576 = smul.u32 %s574, 8
                %s577 = scalar_lea.vmem %s558, %s575 [#allocation8]
                %s578 = scalar_lea.vmem %s560, %s576
              $region88: #{tpu_custom_call.1} parent=75 // loop_footer
                %s564 = sadd.s32 %s562, 1
              $region89: #{tpu_custom_call.1} parent=75 // loop_footer_branch
                %561 = sbr.rel target = $region85
              $region90: #{tpu_custom_call.1} parent=75 // loop_exit
                _
            $region76: #{tpu_custom_call.1} parent=67 // pred_fallthru
              _
          $region68: #{tpu_custom_call.1} parent=63 // pred_fallthru
            _
          %629 = vnop
        $region64: #{tpu_custom_call.1} parent=47 // pred_fallthru
          _
      $region48: #{tpu_custom_call.1} parent=5 // pred_fallthru
        _
      %p630 = scmp.le.s32.totalorder 2, %s19
      // Predicated region
      $region113: #{tpu_custom_call.1} parent=5 // pred_check
        %p631 = pneg %p630
      $region114: #{tpu_custom_call.1} parent=5 // pred_check_branch
        %633 = sbr.rel (%p631) target = $region116
      $region115: #{tpu_custom_call.1} parent=5 // pred_region
        %s634 = ssub.s32 %s19, 2
        // Predicated region
        $region117: #{tpu_custom_call.1} parent=115 // pred_check
          %p635 = pneg %p200
        $region118: #{tpu_custom_call.1} parent=115 // pred_check_branch
          %637 = sbr.rel (%p635) target = $region120
        $region119: #{tpu_custom_call.1} parent=115 // pred_region
          %s638 = sand.u32 %s185, 1
          %s639 = sand.u32 %s185, 1
          %s640 = smul.addr %s639, 16
          %s641 = scalar_lea.vmem [#allocation8], %s640
        $region120: #{tpu_custom_call.1} parent=115 // pred_fallthru
          _
      $region116: #{tpu_custom_call.1} parent=5 // pred_fallthru
        _
    $region6: #{tpu_custom_call.1} parent=1 // loop_footer
      %s23 = sadd.s32 1, %s19
    $region7: #{tpu_custom_call.1} parent=1 // loop_footer_branch
      %18 = sbr.rel target = $region3
    $region8: #{tpu_custom_call.1} parent=1 // loop_exit
      _
    %642 = vsyncpa [#allocation4], 1
    %s643 = scalar_lea.sflag [#allocation4], 1
    %644 = vsyncpa %s643, 1
    %645 = vsyncpa [#allocation6], 1

// kernel: tpu_custom_call.1
$region0: #{tpu_custom_call.1}
  #allocation0 [shape = 'u32[]', space=smem, size = 0x4, offset = 0x4, fixed_abs, tag = 'smem constant byte address 0x4 - core index']
  #allocation1 [shape = 'u32[144,128]{1,0:T(1,128)}', space=vmem, size = 0x12000, scoped, tag = 'internal scratch']
  #allocation2 [shape = 'f32[1,1]{1,0:T(1,128)S(1)}', space=vmem, size = 0x200, scoped, tag = 'scoped memory for tpu_custom_call.1']
  %s0 = inlined_call_operand.hbm [shape: f32[24,32], index: 0, kind: input, shape index: {}]
  %s1 = inlined_call_operand.hbm [shape: bf16[32,32], index: 1, kind: input, shape index: {}]
  %s2 = inlined_call_operand.vmem [shape: f32[1,32], index: 2, kind: input, shape index: {}]
  %s3 = inlined_call_operand.hbm [shape: bf16[32,32], index: 3, kind: input, shape index: {}]
  %s4 = inlined_call_operand.vmem [shape: f32[1,32], index: 4, kind: input, shape index: {}]
  %s5 = inlined_call_operand.vmem [shape: bf16[1,32], index: 5, kind: input, shape index: {}]
  %s6 = inlined_call_operand.<no memory space> [shape: f32[1,1], index: 6, kind: input, shape index: {}]
  %s7 = inlined_call_operand.vmem [shape: f32[24,1], index: 7, kind: output, shape index: {}]
  %s8 = sld [smem:[#allocation0]]
  $region121: #{tpu_custom_call.1} parent=0
    _
  %s10 = ssub.s32 1, %s8
  %s11 = scalar_select 0, %s10, %s8
  %v12 = vstv %s6
  %13 = vst [vmem:[#allocation2] sm:$0x1] %v12
  $region1: #{tpu_custom_call.1} parent=0
    #allocation3 [shape = 'u8[16384]{0}', space=vmem, size = 0x4000, scoped, tag = 'input window, operand 0']
    #allocation4 [shape = 's32[2]{0}', space=sflag, size = 0x8, scoped, tag = 'scoped memory for tpu_custom_call.1']
    #allocation5 [shape = 'u8[8192]{0}', space=vmem, size = 0x2000, scoped, tag = 'input window, operand 1, single buffered']
    #allocation6 [shape = 's32[1]{0}', space=sflag, size = 0x4, scoped, tag = 'scoped memory for tpu_custom_call.1']
    #allocation7 [shape = 'u8[8192]{0}', space=vmem, size = 0x2000, scoped, tag = 'input window, operand 3, single buffered']
    #allocation8 [shape = 'u8[16384]{0}', space=vmem, size = 0x4000, scoped, tag = 'output window, operand 0']
    %14 = vsyncpa [#allocation4], 0
    %s15 = scalar_lea.sflag [#allocation4], 1
    %16 = vsyncpa %s15, 0
    %17 = vsyncpa [#allocation6], 0
    loop: start=0, step=1, limit=4
    $region2: #{tpu_custom_call.1} parent=1 // loop_pre_header
      _
    $region3: #{tpu_custom_call.1} parent=1 // loop_header
      %s19 = sphi 0, %s23
      %p20 = scmp.ge.s32.totalorder %s19, 4
      %s29 = sphi 0, %s31
      %s32 = sphi 0, %s29
      %s33 = sphi 0, %s32
      %s49 = sphi 0, %s33
      %s53 = sphi 0, %s53
      %s55 = sphi 0, %s53
      %s56 = sphi 0, %s55
      %s70 = sphi 0, %s56
      %s74 = sphi 0, %s74
      %s76 = sphi 0, %s74
      %s77 = sphi 0, %s76
      %s91 = sphi 0, %s77
      %s95 = sphi 0, %s95
      %s97 = sphi 0, %s95
      %s98 = sphi 0, %s97
      %s112 = sphi 0, %s98
      %s116 = sphi 0, %s116
      %s118 = sphi 0, %s116
      %s119 = sphi 0, %s118
      %s133 = sphi 0, %s119
      %s137 = sphi 0, %s137
      %s139 = sphi 0, %s137
      %s140 = sphi 0, %s139
      %s154 = sphi 0, %s140
      %s158 = sphi 0, %s158
      %s160 = sphi 0, %s158
      %s161 = sphi 0, %s160
      %s175 = sphi 0, %s161
      %s181 = sphi 0, %s183
      %s184 = sphi 0, %s181
      %s185 = sphi 0, %s184
      %s201 = sphi 0, %s185
    $region4: #{tpu_custom_call.1} parent=1 // loop_header_branch
      %22 = sbr.rel (%p20) target = $region8
    $region5: #{tpu_custom_call.1} parent=1 // loop_body
      %s24 = ssub.s32 %s19, 1
      %s25 = ssub.s32 %s19, 2
      %s26 = sadd.s32 %s19, 1
      %s27 = ssub.s32 %s19, %s26
      %p28 = scmp.eq.s32.totalorder %s27, 0
      %s30 = sadd.s32 %s29, 1
      %s31 = scalar_select %p28, %s29, %s30
      %p34 = pneg %p28
      %p35 = scmp.eq.s32.totalorder %s19, 1
      %p36 = por %p34, %p35
      %p37 = scmp.ne.s32.totalorder %s29, %s32
      %p38 = scmp.eq.s32.totalorder %s19, 0
      %p39 = por %p37, %p38
      %p40 = scmp.ne.s32.totalorder %s29, %s32
      %p41 = scmp.eq.s32.totalorder %s24, 1
      %p42 = por %p40, %p41
      %p43 = scmp.ne.s32.totalorder %s32, %s33
      %p44 = scmp.eq.s32.totalorder %s24, 0
      %p45 = por %p43, %p44
      %p46 = scmp.ne.s32.totalorder %s32, %s33
      %p47 = scmp.eq.s32.totalorder %s25, 1
      %p48 = por %p46, %p47
      %p50 = scmp.ne.s32.totalorder %s33, %s49
      %p51 = scmp.eq.s32.totalorder %s25, 0
      %p52 = por %p50, %p51
      %s54 = sadd.s32 %s53, 1
      %p57 = scmp.eq.s32.totalorder %s19, 1
      %p58 = scmp.ne.s32.totalorder %s53, %s55
      %p59 = scmp.eq.s32.totalorder %s19, 0
      %p60 = por %p58, %p59
      %p61 = scmp.ne.s32.totalorder %s53, %s55
      %p62 = scmp.eq.s32.totalorder %s24, 1
      %p63 = por %p61, %p62
      %p64 = scmp.ne.s32.totalorder %s55, %s56
      %p65 = scmp.eq.s32.totalorder %s24, 0
      %p66 = por %p64, %p65
      %p67 = scmp.ne.s32.totalorder %s55, %s56
      %p68 = scmp.eq.s32.totalorder %s25, 1
      %p69 = por %p67, %p68
      %p71 = scmp.ne.s32.totalorder %s56, %s70
      %p72 = scmp.eq.s32.totalorder %s25, 0
      %p73 = por %p71, %p72
      %s75 = sadd.s32 %s74, 1
      %p78 = scmp.eq.s32.totalorder %s19, 1
      %p79 = scmp.ne.s32.totalorder %s74, %s76
      %p80 = scmp.eq.s32.totalorder %s19, 0
      %p81 = por %p79, %p80
      %p82 = scmp.ne.s32.totalorder %s74, %s76
      %p83 = scmp.eq.s32.totalorder %s24, 1
      %p84 = por %p82, %p83
      %p85 = scmp.ne.s32.totalorder %s76, %s77
      %p86 = scmp.eq.s32.totalorder %s24, 0
      %p87 = por %p85, %p86
      %p88 = scmp.ne.s32.totalorder %s76, %s77
      %p89 = scmp.eq.s32.totalorder %s25, 1
      %p90 = por %p88, %p89
      %p92 = scmp.ne.s32.totalorder %s77, %s91
      %p93 = scmp.eq.s32.totalorder %s25, 0
      %p94 = por %p92, %p93
      %s96 = sadd.s32 %s95, 1
      %p99 = scmp.eq.s32.totalorder %s19, 1
      %p100 = scmp.ne.s32.totalorder %s95, %s97
      %p101 = scmp.eq.s32.totalorder %s19, 0
      %p102 = por %p100, %p101
      %p103 = scmp.ne.s32.totalorder %s95, %s97
      %p104 = scmp.eq.s32.totalorder %s24, 1
      %p105 = por %p103, %p104
      %p106 = scmp.ne.s32.totalorder %s97, %s98
      %p107 = scmp.eq.s32.totalorder %s24, 0
      %p108 = por %p106, %p107
      %p109 = scmp.ne.s32.totalorder %s97, %s98
      %p110 = scmp.eq.s32.totalorder %s25, 1
      %p111 = por %p109, %p110
      %p113 = scmp.ne.s32.totalorder %s98, %s112
      %p114 = scmp.eq.s32.totalorder %s25, 0
      %p115 = por %p113, %p114
      %s117 = sadd.s32 %s116, 1
      %p120 = scmp.eq.s32.totalorder %s19, 1
      %p121 = scmp.ne.s32.totalorder %s116, %s118
      %p122 = scmp.eq.s32.totalorder %s19, 0
      %p123 = por %p121, %p122
      %p124 = scmp.ne.s32.totalorder %s116, %s118
      %p125 = scmp.eq.s32.totalorder %s24, 1
      %p126 = por %p124, %p125
      %p127 = scmp.ne.s32.totalorder %s118, %s119
      %p128 = scmp.eq.s32.totalorder %s24, 0
      %p129 = por %p127, %p128
      %p130 = scmp.ne.s32.totalorder %s118, %s119
      %p131 = scmp.eq.s32.totalorder %s25, 1
      %p132 = por %p130, %p131
      %p134 = scmp.ne.s32.totalorder %s119, %s133
      %p135 = scmp.eq.s32.totalorder %s25, 0
      %p136 = por %p134, %p135
      %s138 = sadd.s32 %s137, 1
      %p141 = scmp.eq.s32.totalorder %s19, 1
      %p142 = scmp.ne.s32.totalorder %s137, %s139
      %p143 = scmp.eq.s32.totalorder %s19, 0
      %p144 = por %p142, %p143
      %p145 = scmp.ne.s32.totalorder %s137, %s139
      %p146 = scmp.eq.s32.totalorder %s24, 1
      %p147 = por %p145, %p146
      %p148 = scmp.ne.s32.totalorder %s139, %s140
      %p149 = scmp.eq.s32.totalorder %s24, 0
      %p150 = por %p148, %p149
      %p151 = scmp.ne.s32.totalorder %s139, %s140
      %p152 = scmp.eq.s32.totalorder %s25, 1
      %p153 = por %p151, %p152
      %p155 = scmp.ne.s32.totalorder %s140, %s154
      %p156 = scmp.eq.s32.totalorder %s25, 0
      %p157 = por %p155, %p156
      %s159 = sadd.s32 %s158, 1
      %p162 = scmp.eq.s32.totalorder %s19, 1
      %p163 = scmp.ne.s32.totalorder %s158, %s160
      %p164 = scmp.eq.s32.totalorder %s19, 0
      %p165 = por %p163, %p164
      %p166 = scmp.ne.s32.totalorder %s158, %s160
      %p167 = scmp.eq.s32.totalorder %s24, 1
      %p168 = por %p166, %p167
      %p169 = scmp.ne.s32.totalorder %s160, %s161
      %p170 = scmp.eq.s32.totalorder %s24, 0
      %p171 = por %p169, %p170
      %p172 = scmp.ne.s32.totalorder %s160, %s161
      %p173 = scmp.eq.s32.totalorder %s25, 1
      %p174 = por %p172, %p173
      %p176 = scmp.ne.s32.totalorder %s161, %s175
      %p177 = scmp.eq.s32.totalorder %s25, 0
      %p178 = por %p176, %p177
      %s179 = ssub.s32 %s19, %s26
      %p180 = scmp.eq.s32.totalorder %s179, 0
      %s182 = sadd.s32 %s181, 1
      %s183 = scalar_select %p180, %s181, %s182
      %p186 = pneg %p180
      %p187 = scmp.eq.s32.totalorder %s19, 1
      %p188 = por %p186, %p187
      %p189 = scmp.ne.s32.totalorder %s181, %s184
      %p190 = scmp.eq.s32.totalorder %s19, 0
      %p191 = por %p189, %p190
      %p192 = scmp.ne.s32.totalorder %s181, %s184
      %p193 = scmp.eq.s32.totalorder %s24, 1
      %p194 = por %p192, %p193
      %p195 = scmp.ne.s32.totalorder %s184, %s185
      %p196 = scmp.eq.s32.totalorder %s24, 0
      %p197 = por %p195, %p196
      %p198 = scmp.ne.s32.totalorder %s184, %s185
      %p199 = scmp.eq.s32.totalorder %s25, 1
      %p200 = por %p198, %p199
      %p202 = scmp.ne.s32.totalorder %s185, %s201
      %p203 = scmp.eq.s32.totalorder %s25, 0
      %p204 = por %p202, %p203
      %p205 = scmp.le.s32.totalorder 1, %s19
      %p206 = scmp.lt.s32.totalorder %s19, 3
      %p207 = pnand %p205, %p206
      %p208 = pneg %p207
      // Predicated region
      $region9: #{tpu_custom_call.1} parent=5 // pred_check
        _
      $region10: #{tpu_custom_call.1} parent=5 // pred_check_branch
        %210 = sbr.rel (%p207) target = $region12
      $region11: #{tpu_custom_call.1} parent=5 // pred_region
        %s211 = ssub.s32 %s19, 1
        // Predicated region
        $region13: #{tpu_custom_call.1} parent=11 // pred_check
          %p212 = pneg %p66
        $region14: #{tpu_custom_call.1} parent=11 // pred_check_branch
          %214 = sbr.rel (%p212) target = $region16
        $region15: #{tpu_custom_call.1} parent=11 // pred_region
          %s216 = ssub.s32 256, 256
          %217 = vsyncadd [#allocation6], %s216
          %s218 = sshll.u32 [#allocation5], 4
          %s219 = int_to_ptr.vmem [resolvable:$true] %s218
          %224 = dma.hbm_to_vmem [thread:$0]  %s1, 256, %s219, [#allocation6], 64, 64, 4
        $region16: #{tpu_custom_call.1} parent=11 // pred_fallthru
          _
        // Predicated region
        $region17: #{tpu_custom_call.1} parent=11 // pred_check
          %p225 = pneg %p87
        $region18: #{tpu_custom_call.1} parent=11 // pred_check_branch
          %227 = sbr.rel (%p225) target = $region20
        $region19: #{tpu_custom_call.1} parent=11 // pred_region
          _
        $region20: #{tpu_custom_call.1} parent=11 // pred_fallthru
          _
        // Predicated region
        $region21: #{tpu_custom_call.1} parent=11 // pred_check
          %p228 = pneg %p108
        $region22: #{tpu_custom_call.1} parent=11 // pred_check_branch
          %230 = sbr.rel (%p228) target = $region24
        $region23: #{tpu_custom_call.1} parent=11 // pred_region
          %s232 = ssub.s32 256, 256
          %233 = vsyncadd [#allocation6], %s232
          %s234 = sshll.u32 [#allocation7], 4
          %s235 = int_to_ptr.vmem [resolvable:$true] %s234
          %240 = dma.hbm_to_vmem [thread:$0]  %s3, 256, %s235, [#allocation6], 64, 64, 4
        $region24: #{tpu_custom_call.1} parent=11 // pred_fallthru
          _
        // Predicated region
        $region25: #{tpu_custom_call.1} parent=11 // pred_check
          %p241 = pneg %p129
        $region26: #{tpu_custom_call.1} parent=11 // pred_check_branch
          %243 = sbr.rel (%p241) target = $region28
        $region27: #{tpu_custom_call.1} parent=11 // pred_region
          _
        $region28: #{tpu_custom_call.1} parent=11 // pred_fallthru
          _
        // Predicated region
        $region29: #{tpu_custom_call.1} parent=11 // pred_check
          %p244 = pneg %p150
        $region30: #{tpu_custom_call.1} parent=11 // pred_check_branch
          %246 = sbr.rel (%p244) target = $region32
        $region31: #{tpu_custom_call.1} parent=11 // pred_region
          _
        $region32: #{tpu_custom_call.1} parent=11 // pred_fallthru
          _
        // Predicated region
        $region33: #{tpu_custom_call.1} parent=11 // pred_check
          %p247 = pneg %p171
        $region34: #{tpu_custom_call.1} parent=11 // pred_check_branch
          %249 = sbr.rel (%p247) target = $region36
        $region35: #{tpu_custom_call.1} parent=11 // pred_region
          _
        $region36: #{tpu_custom_call.1} parent=11 // pred_fallthru
          _
      $region12: #{tpu_custom_call.1} parent=5 // pred_fallthru
        _
      %p250 = scmp.lt.s32.totalorder %s19, 2
      // Predicated region
      $region37: #{tpu_custom_call.1} parent=5 // pred_check
        %p251 = pneg %p250
      $region38: #{tpu_custom_call.1} parent=5 // pred_check_branch
        %253 = sbr.rel (%p251) target = $region40
      $region39: #{tpu_custom_call.1} parent=5 // pred_region
        // Predicated region
        $region41: #{tpu_custom_call.1} parent=39 // pred_check
          %p254 = pneg %p39
        $region42: #{tpu_custom_call.1} parent=39 // pred_check_branch
          %256 = sbr.rel (%p254) target = $region44
        $region43: #{tpu_custom_call.1} parent=39 // pred_region
          %s257 = sand.u32 %s29, 1
          %s258 = scalar_lea.sflag [#allocation4], %s257
          %s259 = sand.u32 %s29, 1
          %s260 = smul.addr %s259, 16
          %s261 = scalar_lea.vmem [#allocation3], %s260
          %s262 = smul.u32 2, %s19
          %s263 = ssub.s32 3, %s262
          %p264 = scmp.lt.s32.totalorder %s263, 2
          %s265 = scalar_select %p264, %s263, 2
          %s266 = smul.u32 128, %s265
          %s268 = ssub.s32 256, %s266
          %269 = vsyncadd %s258, %s268
          %p270 = scmp.ne.s32.totalorder 0, %s266
          %s271 = smul.addr %s262, 128
          %s272 = scalar_lea.hbm %s0, %s271
          %s273 = smul.u32 8, %s265
          %s274 = sshll.u32 %s261, 4
          %s275 = int_to_ptr.vmem [resolvable:$true] %s274
          %s276 = sshll.u32 %s273, 4
          %280 = dma.hbm_to_vmem [thread:$0]  (%p270), %s272, %s276, %s275, %s258, 128, 128, 8
        $region44: #{tpu_custom_call.1} parent=39 // pred_fallthru
          _
      $region40: #{tpu_custom_call.1} parent=5 // pred_fallthru
        _
      %p281 = scmp.le.s32.totalorder 1, %s19
      %p282 = scmp.lt.s32.totalorder %s19, 3
      %p283 = pnand %p281, %p282
      %p284 = pneg %p283
      // Predicated region
      $region45: #{tpu_custom_call.1} parent=5 // pred_check
        _
      $region46: #{tpu_custom_call.1} parent=5 // pred_check_branch
        %286 = sbr.rel (%p283) target = $region48
      $region47: #{tpu_custom_call.1} parent=5 // pred_region
        %s287 = ssub.s32 %s19, 1
        %s288 = sand.u32 %s32, 1
        %s289 = scalar_lea.sflag [#allocation4], %s288
        %s290 = sand.u32 %s32, 1
        %s291 = smul.addr %s290, 16
        %s292 = scalar_lea.vmem [#allocation3], %s291
        // Predicated region
        $region49: #{tpu_custom_call.1} parent=47 // pred_check
          %p293 = pneg %p45
        $region50: #{tpu_custom_call.1} parent=47 // pred_check_branch
          %295 = sbr.rel (%p293) target = $region52
        $region51: #{tpu_custom_call.1} parent=47 // pred_region
          %296 = dma.done %s289, 256
        $region52: #{tpu_custom_call.1} parent=47 // pred_fallthru
          _
        // Predicated region
        $region53: #{tpu_custom_call.1} parent=47 // pred_check
          %p297 = pneg %p66
        $region54: #{tpu_custom_call.1} parent=47 // pred_check_branch
          %299 = sbr.rel (%p297) target = $region56
        $region55: #{tpu_custom_call.1} parent=47 // pred_region
          %300 = dma.done [#allocation6], 256
        $region56: #{tpu_custom_call.1} parent=47 // pred_fallthru
          _
        // Predicated region
        $region57: #{tpu_custom_call.1} parent=47 // pred_check
          %p301 = pneg %p108
        $region58: #{tpu_custom_call.1} parent=47 // pred_check_branch
          %303 = sbr.rel (%p301) target = $region60
        $region59: #{tpu_custom_call.1} parent=47 // pred_region
          %304 = dma.done [#allocation6], 256
        $region60: #{tpu_custom_call.1} parent=47 // pred_fallthru
          _
        %s305 = sand.u32 %s32, 1
        %s306 = scalar_lea.sflag [#allocation4], %s305
        %s307 = sand.u32 %s32, 1
        %s308 = smul.addr %s307, 16
        %s309 = scalar_lea.vmem [#allocation3], %s308
        %p310 = pneg %p45
        %p311 = pneg %p42
        %p312 = pneg %p66
        %p313 = pneg %p63
        %p314 = pneg %p87
        %p315 = pneg %p84
        %p316 = pneg %p108
        %p317 = pneg %p105
        %p318 = pneg %p129
        %p319 = pneg %p126
        %p320 = pneg %p150
        %p321 = pneg %p147
        %p322 = pneg %p171
        %p323 = pneg %p168
        %p324 = pneg %p197
        %p325 = pneg %p194
        %s326 = sand.u32 %s184, 1
        %s327 = sand.u32 %s184, 1
        %s328 = smul.addr %s327, 16
        %s329 = scalar_lea.vmem [#allocation8], %s328
        %s330 = smul.u32 2, %s24
        %s331 = ssub.s32 3, %s330
        %p332 = scmp.lt.s32.totalorder %s331, 2
        %s333 = scalar_select %p332, %s331, 2
        %s334 = smul.u32 128, %s333
        %s335 = smul.u32 2, %s24
        %s336 = ssub.s32 3, %s335
        %p337 = scmp.lt.s32.totalorder %s336, 2
        %s338 = scalar_select %p337, %s336, 2
        %s339 = smul.u32 128, %s338
        %v341 = vld [vmem:[%s292] sm:$0xff]
        %v342 = vld [vmem:[%s292 + $0x8] sm:$0xff]
        %v343 = vpack.c.bf16 %v342, %v341
        %v344 = vld [vmem:[#allocation5] sm:$0xf]
        %v345 = vld [vmem:[#allocation5 + $0x4] sm:$0xf]
        %v346 = vld [vmem:[#allocation5 + $0x8] sm:$0xf]
        %v347 = vld [vmem:[#allocation5 + $0xc] sm:$0xf]
        %v348 = vld [vmem:[%s2] sm:$0x1]
        %v350 = vlaneseq
        %v351 = vshrl.u32 %v350, 7
        %v352 = vsub.s32 0, %v351
        %v353 = vrot.slane %v348, %v352
        %v359 = vunpack.c.l.b16 %v344
        %v360 = vunpack.c.l.b16 %v345
        %v361 = vunpack.c.l.b16 %v346
        %v362 = vunpack.c.l.b16 %v347
        %v363 = vpack.c.b16 %v360, %v359
        %v364 = vpack.c.b16 %v362, %v361
        %vm367 = vcmask 261120
        %v369 = vsel %vm367, %v343, 0
        %371 = vmatprep.subr.bf16.mxu0 0
        %372 = vmatpush1.bf16.msra.mxu0 %v363
        %373 = vmatprep.subr.bf16.mxu0 0
        %374 = vmatpush1.bf16.msra.mxu0 %v364
        %375 = vmatprep.subr.bf16.mxu0 0
        %376 = vmatpush1.bf16.msra.mxu0 0
        %377 = vmatprep.subr.bf16.mxu0 0
        %378 = vmatpush1.bf16.msra.mxu0 0
        %379 = vmatprep.subr.bf16.mxu0 0
        %380 = vmatpush1.bf16.msra.mxu0 0
        %381 = vmatprep.subr.bf16.mxu0 0
        %382 = vmatpush1.bf16.msra.mxu0 0
        %383 = vmatprep.subr.bf16.mxu0 0
        %384 = vmatpush1.bf16.msra.mxu0 0
        %385 = vmatprep.subr.bf16.mxu0 0
        %386 = vmatpush1.bf16.msra.mxu0 0
        %387 = vmatprep.subr.bf16.mxu0 0
        %388 = vmatpush1.bf16.msra.mxu0 0
        %389 = vmatprep.subr.bf16.mxu0 0
        %390 = vmatpush1.bf16.msra.mxu0 0
        %391 = vmatprep.subr.bf16.mxu0 0
        %392 = vmatpush1.bf16.msra.mxu0 0
        %393 = vmatprep.subr.bf16.mxu0 0
        %394 = vmatpush1.bf16.msra.mxu0 0
        %395 = vmatprep.subr.bf16.mxu0 0
        %396 = vmatpush1.bf16.msra.mxu0 0
        %397 = vmatprep.subr.bf16.mxu0 0
        %398 = vmatpush1.bf16.msra.mxu0 0
        %399 = vmatprep.subr.bf16.mxu0 0
        %400 = vmatpush1.bf16.msra.mxu0 0
        %401 = vmatprep.subr.bf16.mxu0 0
        %402 = vmatpush1.bf16.msra.mxu0 0
        %403 = vmatprep.mubr.bf16.mxu0 0
        %404 = vmatmul.mubr.bf16.gmra.mrb[0].mxu0 %v369
        %v405 = vpop.f32.mrb[0].mxu0
        %v406 = vadd.f32 %v353, %v405
        %v407 = vpop.f32.mrb[0].mxu0
        %v408 = vpop.f32.mrb[0].mxu0
        %v409 = vadd.f32 %v353, %v408
        %v410 = vpop.f32.mrb[0].mxu0
        %411 = vdwg.mxu0
        %v412 = vmax.f32 %v406, 0.0
        %v413 = vmax.f32 %v409, 0.0
        %v414 = vpack.c.bf16 %v413, %v412
        %v415 = vld [vmem:[#allocation7] sm:$0xf]
        %v416 = vld [vmem:[#allocation7 + $0x4] sm:$0xf]
        %v417 = vld [vmem:[#allocation7 + $0x8] sm:$0xf]
        %v418 = vld [vmem:[#allocation7 + $0xc] sm:$0xf]
        %v419 = vld [vmem:[%s4] sm:$0x1]
        %v421 = vlaneseq
        %v422 = vshrl.u32 %v421, 7
        %v423 = vsub.s32 0, %v422
        %v424 = vrot.slane %v419, %v423
        %v430 = vunpack.c.l.b16 %v415
        %v431 = vunpack.c.l.b16 %v416
        %v432 = vunpack.c.l.b16 %v417
        %v433 = vunpack.c.l.b16 %v418
        %v434 = vpack.c.b16 %v431, %v430
        %v435 = vpack.c.b16 %v433, %v432
        %v439 = vsel %vm367, %v414, 0
        %441 = vmatprep.subr.bf16.mxu0 0
        %442 = vmatpush1.bf16.msra.mxu0 %v434
        %443 = vmatprep.subr.bf16.mxu0 0
        %444 = vmatpush1.bf16.msra.mxu0 %v435
        %445 = vmatprep.subr.bf16.mxu0 0
        %446 = vmatpush1.bf16.msra.mxu0 0
        %447 = vmatprep.subr.bf16.mxu0 0
        %448 = vmatpush1.bf16.msra.mxu0 0
        %449 = vmatprep.subr.bf16.mxu0 0
        %450 = vmatpush1.bf16.msra.mxu0 0
        %451 = vmatprep.subr.bf16.mxu0 0
        %452 = vmatpush1.bf16.msra.mxu0 0
        %453 = vmatprep.subr.bf16.mxu0 0
        %454 = vmatpush1.bf16.msra.mxu0 0
        %455 = vmatprep.subr.bf16.mxu0 0
        %456 = vmatpush1.bf16.msra.mxu0 0
        %457 = vmatprep.subr.bf16.mxu0 0
        %458 = vmatpush1.bf16.msra.mxu0 0
        %459 = vmatprep.subr.bf16.mxu0 0
        %460 = vmatpush1.bf16.msra.mxu0 0
        %461 = vmatprep.subr.bf16.mxu0 0
        %462 = vmatpush1.bf16.msra.mxu0 0
        %463 = vmatprep.subr.bf16.mxu0 0
        %464 = vmatpush1.bf16.msra.mxu0 0
        %465 = vmatprep.subr.bf16.mxu0 0
        %466 = vmatpush1.bf16.msra.mxu0 0
        %467 = vmatprep.subr.bf16.mxu0 0
        %468 = vmatpush1.bf16.msra.mxu0 0
        %469 = vmatprep.subr.bf16.mxu0 0
        %470 = vmatpush1.bf16.msra.mxu0 0
        %471 = vmatprep.subr.bf16.mxu0 0
        %472 = vmatpush1.bf16.msra.mxu0 0
        %473 = vmatprep.mubr.bf16.mxu0 0
        %474 = vmatmul.mubr.bf16.gmra.mrb[0].mxu0 %v439
        %v475 = vpop.f32.mrb[0].mxu0
        %v476 = vadd.f32 %v424, %v475
        %v477 = vpop.f32.mrb[0].mxu0
        %v478 = vpop.f32.mrb[0].mxu0
        %v479 = vadd.f32 %v424, %v478
        %v480 = vpop.f32.mrb[0].mxu0
        %481 = vdwg.mxu0
        %v482 = vmax.f32 %v476, 0.0
        %v483 = vmax.f32 %v479, 0.0
        %v484 = vld [vmem:[%s5] sm:$0x1]
        %v485 = vunpack.c.l.bf16 %v484
        %v486 = vlaneseq
        %v487 = vshrl.u32 %v486, 7
        %v488 = vsub.s32 0, %v487
        %v489 = vrot.slane %v485, %v488
        %v490 = vmul.f32 %v482, %v489
        %v491 = vmul.f32 %v483, %v489
        %v492 = vsel %vm367, %v490, 0.0
        %493 = vadd.xlane.f32.xlu0 %v492
        %v494 = vpop.xlane.xlu0 %493
        %v495 = vsel %vm367, %v491, 0.0
        %496 = vadd.xlane.f32.xlu0 %v495
        %v497 = vpop.xlane.xlu0 %496
        %v498 = vld [vmem:[#allocation2] sm:$0x1]
        %v500 = vlaneseq
        %v501 = vshrl.u32 %v500, 7
        %v502 = vsub.s32 0, %v501
        %v503 = vrot.slane %v498, %v502
        %v505 = vadd.f32 %v494, %v503
        %v506 = vadd.f32 %v497, %v503
        %vm507 = vcmask 7168
        %508 = vst.msk [vmem:[%s329] sm:$0xff] %vm507, %v505
        %509 = vst.msk [vmem:[%s329 + $0x8] sm:$0xff] %vm507, %v506
        %s510 = sand.u32 %s184, 1
        %s511 = sand.u32 %s184, 1
        %s512 = smul.addr %s511, 16
        %s513 = scalar_lea.vmem [#allocation8], %s512
        // Predicated region
        $region61: #{tpu_custom_call.1} parent=47 // pred_check
          %p514 = pneg %p194
        $region62: #{tpu_custom_call.1} parent=47 // pred_check_branch
          %516 = sbr.rel (%p514) target = $region64
        $region63: #{tpu_custom_call.1} parent=47 // pred_region
          %s517 = smul.u32 2, %s24
          %s518 = ssub.s32 3, %s517
          %p519 = scmp.lt.s32.totalorder %s518, 2
          %s520 = scalar_select %p519, %s518, 2
          %s521 = smul.u32 128, %s520
          %p522 = scmp.ne.s32.totalorder 0, %s521
          %s523 = smul.addr %s517, 8
          %s524 = scalar_lea.vmem %s7, %s523
          // Predicated region
          $region65: #{tpu_custom_call.1} parent=63 // pred_check
            %p525 = pneg %p522
          $region66: #{tpu_custom_call.1} parent=63 // pred_check_branch
            %527 = sbr.rel (%p525) target = $region68
          $region67: #{tpu_custom_call.1} parent=63 // pred_region
            // Predicated region
            $region69: #{tpu_custom_call.1} parent=67 // pred_check
              _
            $region70: #{tpu_custom_call.1} parent=67 // pred_check_branch
              %529 = sbr.rel (0) target = $region72
            $region71: #{tpu_custom_call.1} parent=67 // pred_region
              // Predicated region
              $region91: #{tpu_custom_call.1} parent=71 // pred_check
                _
              $region92: #{tpu_custom_call.1} parent=71 // pred_check_branch
                %580 = sbr.rel (0) target = $region94
              $region93: #{tpu_custom_call.1} parent=71 // pred_region
                %s581 = sshrl.u32 %s520, 1
                // While loop
                $region95: #{tpu_custom_call.1} parent=93 // loop_pre_header
                  _
                $region96: #{tpu_custom_call.1} parent=93 // loop_header
                  %s583 = sphi 0, %s585
                  %p584 = scmp.ge.s32.totalorder %s583, %s581
                  %s588 = sphi 0, %s597
                  %s589 = sphi %s513, %s600
                  %s590 = sphi %s524, %s601
                $region97: #{tpu_custom_call.1} parent=93 // loop_header_branch
                  %587 = sbr.rel (%p584) target = $region101
                $region98: #{tpu_custom_call.1} parent=93 // loop_body
                  %v591 = vld [vmem:[%s589] sm:$0xff]
                  %592 = vst [vmem:[%s590] sm:$0xff] %v591
                  %v593 = vld [vmem:[%s589 + $0x8] sm:$0xff]
                  %594 = vst [vmem:[%s590 + $0x8] sm:$0xff] %v593
                  %s595 = sadd.s32 1, %s588
                  %p596 = scmp.ge.s32.totalorder %s595, %s581
                  %s597 = scalar_select %p596, 0, %s595
                  %s598 = smul.u32 %s597, 16
                  %s599 = smul.u32 %s597, 16
                  %s600 = scalar_lea.vmem %s513, %s598 [#allocation8]
                  %s601 = scalar_lea.vmem %s524, %s599
                $region99: #{tpu_custom_call.1} parent=93 // loop_footer
                  %s585 = sadd.s32 %s583, 1
                $region100: #{tpu_custom_call.1} parent=93 // loop_footer_branch
                  %582 = sbr.rel target = $region96
                $region101: #{tpu_custom_call.1} parent=93 // loop_exit
                  _
                %s602 = sshrl.u32 %s520, 1
                %s603 = sand.u32 %s520, 1
                %s604 = smul.u32 %s602, 2
                %s605 = smul.u32 8, %s604
                %s606 = scalar_lea.vmem %s513, %s605 [#allocation8]
                %s607 = smul.u32 8, %s604
                %s608 = scalar_lea.vmem %s524, %s607
                // While loop
                $region102: #{tpu_custom_call.1} parent=93 // loop_pre_header
                  _
                $region103: #{tpu_custom_call.1} parent=93 // loop_header
                  %s610 = sphi 0, %s612
                  %p611 = scmp.ge.s32.totalorder %s610, %s603
                  %s615 = sphi 0, %s622
                  %s616 = sphi %s606, %s625
                  %s617 = sphi %s608, %s626
                $region104: #{tpu_custom_call.1} parent=93 // loop_header_branch
                  %614 = sbr.rel (%p611) target = $region108
                $region105: #{tpu_custom_call.1} parent=93 // loop_body
                  %v618 = vld [vmem:[%s616] sm:$0xff]
                  %619 = vst [vmem:[%s617] sm:$0xff] %v618
                  %s620 = sadd.s32 1, %s615
                  %p621 = scmp.ge.s32.totalorder %s620, %s603
                  %s622 = scalar_select %p621, 0, %s620
                  %s623 = smul.u32 %s622, 8
                  %s624 = smul.u32 %s622, 8
                  %s625 = scalar_lea.vmem %s606, %s623 [#allocation8]
                  %s626 = scalar_lea.vmem %s608, %s624
                $region106: #{tpu_custom_call.1} parent=93 // loop_footer
                  %s612 = sadd.s32 %s610, 1
                $region107: #{tpu_custom_call.1} parent=93 // loop_footer_branch
                  %609 = sbr.rel target = $region103
                $region108: #{tpu_custom_call.1} parent=93 // loop_exit
                  _
              $region94: #{tpu_custom_call.1} parent=71 // pred_fallthru
                _
              // Predicated region
              $region109: #{tpu_custom_call.1} parent=71 // pred_check
                _
              $region110: #{tpu_custom_call.1} parent=71 // pred_check_branch
                %628 = sbr.rel target = $region112
              $region111: #{tpu_custom_call.1} parent=71 // pred_region
                _
              $region112: #{tpu_custom_call.1} parent=71 // pred_fallthru
                _
            $region72: #{tpu_custom_call.1} parent=67 // pred_fallthru
              _
            // Predicated region
            $region73: #{tpu_custom_call.1} parent=67 // pred_check
              _
            $region74: #{tpu_custom_call.1} parent=67 // pred_check_branch
              %531 = sbr.rel target = $region76
            $region75: #{tpu_custom_call.1} parent=67 // pred_region
              %s533 = sshrl.u32 %s520, 1
              // While loop
              $region77: #{tpu_custom_call.1} parent=75 // loop_pre_header
                _
              $region78: #{tpu_custom_call.1} parent=75 // loop_header
                %s535 = sphi 0, %s537
                %p536 = scmp.ge.s32.totalorder %s535, %s533
                %s540 = sphi 0, %s549
                %s541 = sphi %s513, %s552
                %s542 = sphi %s524, %s553
              $region79: #{tpu_custom_call.1} parent=75 // loop_header_branch
                %539 = sbr.rel (%p536) target = $region83
              $region80: #{tpu_custom_call.1} parent=75 // loop_body
                %v543 = vld [vmem:[%s541] sm:$0xff]
                %544 = vst [vmem:[%s542] sm:$0xff] %v543
                %v545 = vld [vmem:[%s541 + $0x8] sm:$0xff]
                %546 = vst [vmem:[%s542 + $0x8] sm:$0xff] %v545
                %s547 = sadd.s32 1, %s540
                %p548 = scmp.ge.s32.totalorder %s547, %s533
                %s549 = scalar_select %p548, 0, %s547
                %s550 = smul.u32 %s549, 16
                %s551 = smul.u32 %s549, 16
                %s552 = scalar_lea.vmem %s513, %s550 [#allocation8]
                %s553 = scalar_lea.vmem %s524, %s551
              $region81: #{tpu_custom_call.1} parent=75 // loop_footer
                %s537 = sadd.s32 %s535, 1
              $region82: #{tpu_custom_call.1} parent=75 // loop_footer_branch
                %534 = sbr.rel target = $region78
              $region83: #{tpu_custom_call.1} parent=75 // loop_exit
                _
              %s554 = sshrl.u32 %s520, 1
              %s555 = sand.u32 %s520, 1
              %s556 = smul.u32 %s554, 2
              %s557 = smul.u32 8, %s556
              %s558 = scalar_lea.vmem %s513, %s557 [#allocation8]
              %s559 = smul.u32 8, %s556
              %s560 = scalar_lea.vmem %s524, %s559
              // While loop
              $region84: #{tpu_custom_call.1} parent=75 // loop_pre_header
                _
              $region85: #{tpu_custom_call.1} parent=75 // loop_header
                %s562 = sphi 0, %s564
                %p563 = scmp.ge.s32.totalorder %s562, %s555
                %s567 = sphi 0, %s574
                %s568 = sphi %s558, %s577
                %s569 = sphi %s560, %s578
              $region86: #{tpu_custom_call.1} parent=75 // loop_header_branch
                %566 = sbr.rel (%p563) target = $region90
              $region87: #{tpu_custom_call.1} parent=75 // loop_body
                %v570 = vld [vmem:[%s568] sm:$0xff]
                %571 = vst [vmem:[%s569] sm:$0xff] %v570
                %s572 = sadd.s32 1, %s567
                %p573 = scmp.ge.s32.totalorder %s572, %s555
                %s574 = scalar_select %p573, 0, %s572
                %s575 = smul.u32 %s574, 8
                %s576 = smul.u32 %s574, 8
                %s577 = scalar_lea.vmem %s558, %s575 [#allocation8]
                %s578 = scalar_lea.vmem %s560, %s576
              $region88: #{tpu_custom_call.1} parent=75 // loop_footer
                %s564 = sadd.s32 %s562, 1
              $region89: #{tpu_custom_call.1} parent=75 // loop_footer_branch
                %561 = sbr.rel target = $region85
              $region90: #{tpu_custom_call.1} parent=75 // loop_exit
                _
            $region76: #{tpu_custom_call.1} parent=67 // pred_fallthru
              _
          $region68: #{tpu_custom_call.1} parent=63 // pred_fallthru
            _
          %629 = vnop
        $region64: #{tpu_custom_call.1} parent=47 // pred_fallthru
          _
      $region48: #{tpu_custom_call.1} parent=5 // pred_fallthru
        _
      %p630 = scmp.le.s32.totalorder 2, %s19
      // Predicated region
      $region113: #{tpu_custom_call.1} parent=5 // pred_check
        %p631 = pneg %p630
      $region114: #{tpu_custom_call.1} parent=5 // pred_check_branch
        %633 = sbr.rel (%p631) target = $region116
      $region115: #{tpu_custom_call.1} parent=5 // pred_region
        %s634 = ssub.s32 %s19, 2
        // Predicated region
        $region117: #{tpu_custom_call.1} parent=115 // pred_check
          %p635 = pneg %p200
        $region118: #{tpu_custom_call.1} parent=115 // pred_check_branch
          %637 = sbr.rel (%p635) target = $region120
        $region119: #{tpu_custom_call.1} parent=115 // pred_region
          %s638 = sand.u32 %s185, 1
          %s639 = sand.u32 %s185, 1
          %s640 = smul.addr %s639, 16
          %s641 = scalar_lea.vmem [#allocation8], %s640
        $region120: #{tpu_custom_call.1} parent=115 // pred_fallthru
          _
      $region116: #{tpu_custom_call.1} parent=5 // pred_fallthru
        _
    $region6: #{tpu_custom_call.1} parent=1 // loop_footer
      %s23 = sadd.s32 1, %s19
    $region7: #{tpu_custom_call.1} parent=1 // loop_footer_branch
      %18 = sbr.rel target = $region3
    $region8: #{tpu_custom_call.1} parent=1 // loop_exit
      _
    %642 = vsyncpa [#allocation4], 1
    %s643 = scalar_lea.sflag [#allocation4], 1
    %644 = vsyncpa %s643, 1
    %645 = vsyncpa [#allocation6], 1

</llo_original>
